<compile_context>
chip_gen: v6e
topology: v6e:2x2x1
jax: 0.10.0
libtpu: 0.0.40
codegen_flags: <defaults>
</compile_context>

<pallas_src>
import functools

import jax
import jax.numpy as jnp
from jax import lax
from jax.experimental import pallas as pl
from jax.experimental.pallas import tpu as pltpu


def _round_up(x, m):
    return ((x + m - 1) // m) * m


# ----------------------------- Pallas kernel ---------------------------------
def _conv_bn_relu_kernel(x_ref, w_ref, b_ref, o_ref, *,
                         kh, kw, stride, bt, th, Wo, Cin, tn, fuse_taps):
    """One grid step = (batch block, block of `th` output rows, Cout block).

    x_ref : (bt, Hp, Wp, Cin)   bf16  padded images (block index changes only with nb)
    w_ref : (kh*kw*Cin, tn)     bf16  conv weights in im2col order, BN scale pre-folded
    b_ref : (1, tn)             f32   folded BN bias
    o_ref : (bt, th, Wo, tn)    bf16
    """
    hb = pl.program_id(1)
    row0 = pl.multiple_of(hb * (th * stride), th * stride)

    def load_tap(b, di, dj):
        if stride == 1:
            return x_ref[b, pl.ds(row0 + di, th), dj:dj + Wo, :]
        # Strided read: fetch only the rows/cols actually needed (no dense slab +
        # in-register strided gather).
        return x_ref[b, pl.ds(row0 + di, th, stride), pl.ds(dj, Wo, stride), :]

    if fuse_taps:
        # Small Cin: in-VMEM im2col slab, single matmul with K = kh*kw*Cin.
        slabs = []
        for b in range(bt):
            taps = [load_tap(b, t // kw, t % kw) for t in range(kh * kw)]
            slabs.append(taps[0] if len(taps) == 1
                         else jnp.concatenate(taps, axis=-1))        # (th, Wo, K)
        a = slabs[0] if bt == 1 else jnp.concatenate(slabs, axis=0)  # (bt*th, Wo, K)
        a = a.reshape(bt * th * Wo, kh * kw * Cin)                   # one reshape/step
        y = jnp.dot(a, w_ref[...], preferred_element_type=jnp.float32)
        y = jnp.maximum(y + b_ref[...], 0.0)                         # BN bias + ReLU
        o_ref[...] = y.reshape(bt, th, Wo, tn).astype(o_ref.dtype)
    else:
        # Large Cin: per-tap matmuls already keep the MXU K-dimension busy.
        for b in range(bt):
            acc = jnp.zeros((th * Wo, tn), jnp.float32)
            for t in range(kh * kw):
                a = load_tap(b, t // kw, t % kw).reshape(th * Wo, Cin)
                acc = acc + jnp.dot(a, w_ref[pl.ds(t * Cin, Cin), :],
                                    preferred_element_type=jnp.float32)
            y = jnp.maximum(acc + b_ref[...], 0.0)
            o_ref[b] = y.reshape(th, Wo, tn).astype(o_ref.dtype)


# ------------------------------ wrapper (JAX) ---------------------------------
@functools.partial(jax.jit, static_argnames=("stride", "pad"))
def basic_conv2d(x, weight, gamma, beta, running_mean, running_var,
                 *, stride=1, pad=1, eps=1e-3):
    """Fused Conv2d(bias=False) + BatchNorm2d(eval) + ReLU.

    x: [N, Cin, H, W] (NCHW), weight: [Cout, Cin, kh, kw] -> [N, Cout, Ho, Wo] (NCHW).
    """
    N, Cin, H, W = x.shape
    Cout, _, kh, kw = weight.shape
    Ho = (H + 2 * pad - kh) // stride + 1
    Wo = (W + 2 * pad - kw) // stride + 1
    Hp, Wp = H + 2 * pad, W + 2 * pad
    Cout_p = _round_up(Cout, 128)                 # lane-dense output channels
    Ktot = kh * kw * Cin

    # bf16 BEFORE the layout transpose + spatial pad: halves wrapper HBM traffic.
    xp = jnp.pad(x.astype(jnp.bfloat16).transpose(0, 2, 3, 1),
                 ((0, 0), (pad, pad), (pad, pad), (0, 0)))

    # Fold BatchNorm (inference) into per-channel scale/bias; fold scale into weights.
    inv_std = lax.rsqrt(running_var.astype(jnp.float32) + eps)
    scale = gamma.astype(jnp.float32) * inv_std
    bias = beta.astype(jnp.float32) - running_mean.astype(jnp.float32) * scale
    w = weight.astype(jnp.float32) * scale[:, None, None, None]       # [Cout,Cin,kh,kw]
    w2d = w.transpose(2, 3, 1, 0).reshape(Ktot, Cout)                 # im2col (kh,kw,Cin)
    w2d = jnp.pad(w2d, ((0, 0), (0, Cout_p - Cout))).astype(jnp.bfloat16)
    bias_p = jnp.pad(bias, (0, Cout_p - Cout)).reshape(1, Cout_p)

    # ---- tiling ----------------------------------------------------------------
    tn = 256 if Cout_p % 256 == 0 else 128        # Cout tile (bounds acc, matches MXU)
    TARGET = 512                                  # target GEMM rows per grid step
    th = 1
    for d in range(1, Ho + 1):                    # largest divisor of Ho with th*Wo<=512
        if Ho % d == 0 and d * Wo <= TARGET:
            th = d
    bt = 1
    if th == Ho and N > 1:                        # small spatial map: fold batch, but
        for d in range(1, N + 1):                 # keep a >1-extent parallel axis (v7x)
            if (N % d == 0 and d * Ho * Wo <= TARGET
                    and (N // d) * (Cout_p // tn) >= 2):
                bt = d

    fuse_taps = Cin <= 64                         # tap fusion only pays off for small Cin

    kern = functools.partial(_conv_bn_relu_kernel, kh=kh, kw=kw, stride=stride,
                             bt=bt, th=th, Wo=Wo, Cin=Cin, tn=tn, fuse_taps=fuse_taps)

    # ---- VMEM budget (double-buffered blocks + in-kernel temporaries) ----------
    xblk = bt * Hp * Wp * Cin * 2
    wblk = Ktot * tn * 2
    bblk = 8 * 128 * 4
    oblk = bt * th * Wo * tn * 2
    tmp = bt * th * Wo * (Ktot * 2 + tn * 4)      # im2col slab (bf16) + f32 matmul result
    vmem_need = 2 * (xblk + wblk + bblk + oblk) + tmp
    try:
        cap = int(0.85 * pltpu.get_tpu_info().vmem_capacity_bytes)   # 64 MiB on v7x
    except Exception:
        cap = 48 * 2 ** 20                                           # safe everywhere
    vmem_limit = int(min(max(int(1.4 * vmem_need), 32 * 2 ** 20), cap))

    out_nhwc = pl.pallas_call(
        kern,
        out_shape=jax.ShapeDtypeStruct((N, Ho, Wo, Cout_p), jnp.bfloat16),
        grid_spec=pltpu.PrefetchScalarGridSpec(
            num_scalar_prefetch=0,
            grid=(N // bt, Ho // th, Cout_p // tn),
            in_specs=[
                pl.BlockSpec((bt, Hp, Wp, Cin), lambda nb, hb, cb: (nb, 0, 0, 0)),
                pl.BlockSpec((Ktot, tn), lambda nb, hb, cb: (0, cb)),
                pl.BlockSpec((1, tn), lambda nb, hb, cb: (0, cb)),
            ],
            out_specs=pl.BlockSpec((bt, th, Wo, tn),
                                   lambda nb, hb, cb: (nb, hb, 0, cb)),
        ),
        compiler_params=pltpu.CompilerParams(
            dimension_semantics=("parallel", "parallel", "parallel"),
            vmem_limit_bytes=vmem_limit),
    )(xp, w2d, bias_p)

    # Trim Cout padding + NCHW transpose on bf16; f32 only at the module boundary.
    return out_nhwc[:, :, :, :Cout].transpose(0, 3, 1, 2).astype(jnp.float32)


# --------------------------------- main ---------------------------------------
if __name__ == "__main__":
    key = jax.random.PRNGKey(0)
    kx, kw_ = jax.random.split(key)

    # Small shapes: batch=2, in_channels=4, out_channels=8, spatial=16, 3x3 conv, pad=1.
    N, Cin, H, W = 2, 4, 16, 16
    Cout, kh, kwid = 8, 3, 3

    x = jax.random.normal(kx, (N, Cin, H, W), dtype=jnp.float32)
    weight = jax.random.normal(kw_, (Cout, Cin, kh, kwid), dtype=jnp.float32) * 0.1

    # Deterministic BatchNorm parameters / running stats.
    gamma = 0.5 + 0.05 * jnp.arange(Cout, dtype=jnp.float32)
    beta = -0.1 + 0.02 * jnp.arange(Cout, dtype=jnp.float32)
    running_mean = 0.01 * jnp.arange(Cout, dtype=jnp.float32)
    running_var = 1.0 + 0.1 * jnp.arange(Cout, dtype=jnp.float32)

    out = basic_conv2d(x, weight, gamma, beta, running_mean, running_var,
                       stride=1, pad=1)
    out = jax.block_until_ready(out)

    # Pure-JAX f32 reference (conv -> BN eval -> ReLU).
    y_ref = lax.conv_general_dilated(
        x, weight, window_strides=(1, 1), padding=((1, 1), (1, 1)),
        dimension_numbers=("NCHW", "OIHW", "NCHW"))
    inv_std = 1.0 / jnp.sqrt(running_var + 1e-3)
    y_ref = (y_ref - running_mean[None, :, None, None]) * inv_std[None, :, None, None]
    y_ref = y_ref * gamma[None, :, None, None] + beta[None, :, None, None]
    y_ref = jnp.maximum(y_ref, 0.0)

    assert out.shape == (N, Cout, H, W), out.shape
    # bf16 operands + bf16 output storage (f32 accumulation) -> loosened tolerance.
    max_err = float(jnp.max(jnp.abs(out - y_ref)))
    assert jnp.allclose(out, y_ref, atol=5e-2, rtol=5e-2), max_err

    print("KERNEL_OK")
</pallas_src>

<mosaic_0001>
module attributes {stable_mosaic.version = 11 : i64} {
  func.func @_conv_bn_relu_kernel(%arg0: i32, %arg1: i32, %arg2: i32, %arg3: memref<1x18x18x4xbf16, #tpu.memory_space<vmem>>, %arg4: memref<36x128xbf16, #tpu.memory_space<vmem>>, %arg5: memref<1x128xf32, #tpu.memory_space<vmem>>, %arg6: memref<1x16x16x128xbf16, #tpu.memory_space<vmem>>) attributes {dimension_semantics = [#tpu.dimension_semantics<parallel>, #tpu.dimension_semantics<parallel>, #tpu.dimension_semantics<parallel>], iteration_bounds = array<i64: 2, 1, 1>, scalar_prefetch = 0 : i64, scratch_operands = 0 : i64, tpu.core_type = #tpu.core_type<tc>, window_params = [{transform_indices = @transform_0, window_bounds = array<i64: 1, 18, 18, 4>}, {transform_indices = @transform_1, window_bounds = array<i64: 36, 128>}, {transform_indices = @transform_2, window_bounds = array<i64: 1, 128>}, {transform_indices = @transform_3, window_bounds = array<i64: 1, 16, 16, 128>}]} {
    %c16_i32 = arith.constant 16 : i32
    %0 = arith.muli %arg1, %c16_i32 : i32
    %1 = tpu.assume_multiple %0, 16 : i32
    %c0_i32 = arith.constant 0 : i32
    %2 = arith.addi %1, %c0_i32 : i32
    %c0 = arith.constant 0 : index
    %3 = arith.index_cast %2 : i32 to index
    %c0_0 = arith.constant 0 : index
    %c0_1 = arith.constant 0 : index
    %4 = vector.load %arg3[%c0, %3, %c0_0, %c0_1] : memref<1x18x18x4xbf16, #tpu.memory_space<vmem>>, vector<1x16x16x4xbf16>
    %5 = vector.shape_cast %4 : vector<1x16x16x4xbf16> to vector<16x16x4xbf16>
    %c0_i32_2 = arith.constant 0 : i32
    %6 = arith.addi %1, %c0_i32_2 : i32
    %c0_3 = arith.constant 0 : index
    %7 = arith.index_cast %6 : i32 to index
    %c1 = arith.constant 1 : index
    %c0_4 = arith.constant 0 : index
    %8 = vector.load %arg3[%c0_3, %7, %c1, %c0_4] : memref<1x18x18x4xbf16, #tpu.memory_space<vmem>>, vector<1x16x16x4xbf16>
    %9 = vector.shape_cast %8 : vector<1x16x16x4xbf16> to vector<16x16x4xbf16>
    %c0_i32_5 = arith.constant 0 : i32
    %10 = arith.addi %1, %c0_i32_5 : i32
    %c0_6 = arith.constant 0 : index
    %11 = arith.index_cast %10 : i32 to index
    %c2 = arith.constant 2 : index
    %c0_7 = arith.constant 0 : index
    %12 = vector.load %arg3[%c0_6, %11, %c2, %c0_7] : memref<1x18x18x4xbf16, #tpu.memory_space<vmem>>, vector<1x16x16x4xbf16>
    %13 = vector.shape_cast %12 : vector<1x16x16x4xbf16> to vector<16x16x4xbf16>
    %c1_i32 = arith.constant 1 : i32
    %14 = arith.addi %1, %c1_i32 : i32
    %c0_8 = arith.constant 0 : index
    %15 = arith.index_cast %14 : i32 to index
    %c0_9 = arith.constant 0 : index
    %c0_10 = arith.constant 0 : index
    %16 = vector.load %arg3[%c0_8, %15, %c0_9, %c0_10] : memref<1x18x18x4xbf16, #tpu.memory_space<vmem>>, vector<1x16x16x4xbf16>
    %17 = vector.shape_cast %16 : vector<1x16x16x4xbf16> to vector<16x16x4xbf16>
    %c1_i32_11 = arith.constant 1 : i32
    %18 = arith.addi %1, %c1_i32_11 : i32
    %c0_12 = arith.constant 0 : index
    %19 = arith.index_cast %18 : i32 to index
    %c1_13 = arith.constant 1 : index
    %c0_14 = arith.constant 0 : index
    %20 = vector.load %arg3[%c0_12, %19, %c1_13, %c0_14] : memref<1x18x18x4xbf16, #tpu.memory_space<vmem>>, vector<1x16x16x4xbf16>
    %21 = vector.shape_cast %20 : vector<1x16x16x4xbf16> to vector<16x16x4xbf16>
    %c1_i32_15 = arith.constant 1 : i32
    %22 = arith.addi %1, %c1_i32_15 : i32
    %c0_16 = arith.constant 0 : index
    %23 = arith.index_cast %22 : i32 to index
    %c2_17 = arith.constant 2 : index
    %c0_18 = arith.constant 0 : index
    %24 = vector.load %arg3[%c0_16, %23, %c2_17, %c0_18] : memref<1x18x18x4xbf16, #tpu.memory_space<vmem>>, vector<1x16x16x4xbf16>
    %25 = vector.shape_cast %24 : vector<1x16x16x4xbf16> to vector<16x16x4xbf16>
    %c2_i32 = arith.constant 2 : i32
    %26 = arith.addi %1, %c2_i32 : i32
    %c0_19 = arith.constant 0 : index
    %27 = arith.index_cast %26 : i32 to index
    %c0_20 = arith.constant 0 : index
    %c0_21 = arith.constant 0 : index
    %28 = vector.load %arg3[%c0_19, %27, %c0_20, %c0_21] : memref<1x18x18x4xbf16, #tpu.memory_space<vmem>>, vector<1x16x16x4xbf16>
    %29 = vector.shape_cast %28 : vector<1x16x16x4xbf16> to vector<16x16x4xbf16>
    %c2_i32_22 = arith.constant 2 : i32
    %30 = arith.addi %1, %c2_i32_22 : i32
    %c0_23 = arith.constant 0 : index
    %31 = arith.index_cast %30 : i32 to index
    %c1_24 = arith.constant 1 : index
    %c0_25 = arith.constant 0 : index
    %32 = vector.load %arg3[%c0_23, %31, %c1_24, %c0_25] : memref<1x18x18x4xbf16, #tpu.memory_space<vmem>>, vector<1x16x16x4xbf16>
    %33 = vector.shape_cast %32 : vector<1x16x16x4xbf16> to vector<16x16x4xbf16>
    %c2_i32_26 = arith.constant 2 : i32
    %34 = arith.addi %1, %c2_i32_26 : i32
    %c0_27 = arith.constant 0 : index
    %35 = arith.index_cast %34 : i32 to index
    %c2_28 = arith.constant 2 : index
    %c0_29 = arith.constant 0 : index
    %36 = vector.load %arg3[%c0_27, %35, %c2_28, %c0_29] : memref<1x18x18x4xbf16, #tpu.memory_space<vmem>>, vector<1x16x16x4xbf16>
    %37 = vector.shape_cast %36 : vector<1x16x16x4xbf16> to vector<16x16x4xbf16>
    %38 = tpu.concatenate %5, %9, %13, %17, %21, %25, %29, %33, %37 in 2 : vector<16x16x4xbf16>, vector<16x16x4xbf16>, vector<16x16x4xbf16>, vector<16x16x4xbf16>, vector<16x16x4xbf16>, vector<16x16x4xbf16>, vector<16x16x4xbf16>, vector<16x16x4xbf16>, vector<16x16x4xbf16> -> vector<16x16x36xbf16>
    %39 = vector.shape_cast %38 : vector<16x16x36xbf16> to vector<256x36xbf16>
    %c0_30 = arith.constant 0 : index
    %c0_31 = arith.constant 0 : index
    %40 = vector.load %arg4[%c0_30, %c0_31] : memref<36x128xbf16, #tpu.memory_space<vmem>>, vector<36x128xbf16>
    %cst = arith.constant dense<0.000000e+00> : vector<256x128xf32>
    %41 = tpu.matmul %39, %40, %cst {dimension_numbers = #tpu.dot_dimension_numbers<[1], [0], [0], [1], [0, 0, 1, 1], [], []>} : vector<256x36xbf16>, vector<36x128xbf16>, vector<256x128xf32> -> vector<256x128xf32>
    %c0_32 = arith.constant 0 : index
    %c0_33 = arith.constant 0 : index
    %42 = vector.load %arg5[%c0_32, %c0_33] : memref<1x128xf32, #tpu.memory_space<vmem>>, vector<1x128xf32>
    %43 = vector.broadcast %42 : vector<1x128xf32> to vector<256x128xf32>
    %44 = arith.addf %41, %43 : vector<256x128xf32>
    %cst_34 = arith.constant 0.000000e+00 : f32
    %45 = vector.broadcast %cst_34 : f32 to vector<256x128xf32>
    %46 = arith.maximumf %44, %45 : vector<256x128xf32>
    %47 = vector.shape_cast %46 : vector<256x128xf32> to vector<1x16x16x128xf32>
    %48 = arith.truncf %47 : vector<1x16x16x128xf32> to vector<1x16x16x128xbf16>
    %c0_35 = arith.constant 0 : index
    %c0_36 = arith.constant 0 : index
    %c0_37 = arith.constant 0 : index
    %c0_38 = arith.constant 0 : index
    %49 = vector.load %arg6[%c0_35, %c0_36, %c0_37, %c0_38] : memref<1x16x16x128xbf16, #tpu.memory_space<vmem>>, vector<1x16x16x128xbf16>
    tpu.vector_store %arg6[%c0_35, %c0_36, %c0_37, %c0_38], %48 {strides = array<i32>} : memref<1x16x16x128xbf16, #tpu.memory_space<vmem>>, vector<1x16x16x128xbf16>,
    return
  }
  func.func @transform_0(%arg0: i32, %arg1: i32, %arg2: i32) -> (i32, i32, i32, i32) {
    %c0_i32 = arith.constant 0 : i32
    %c0_i32_0 = arith.constant 0 : i32
    %c0_i32_1 = arith.constant 0 : i32
    %c0_i32_2 = arith.constant 0 : i32
    return %arg0, %c0_i32, %c0_i32_0, %c0_i32_1 : i32, i32, i32, i32
  }
  func.func @transform_1(%arg0: i32, %arg1: i32, %arg2: i32) -> (i32, i32) {
    %c0_i32 = arith.constant 0 : i32
    %c0_i32_0 = arith.constant 0 : i32
    return %c0_i32, %arg2 : i32, i32
  }
  func.func @transform_2(%arg0: i32, %arg1: i32, %arg2: i32) -> (i32, i32) {
    %c0_i32 = arith.constant 0 : i32
    %c0_i32_0 = arith.constant 0 : i32
    return %c0_i32, %arg2 : i32, i32
  }
  func.func @transform_3(%arg0: i32, %arg1: i32, %arg2: i32) -> (i32, i32, i32, i32) {
    %c0_i32 = arith.constant 0 : i32
    %c0_i32_0 = arith.constant 0 : i32
    return %arg0, %arg1, %c0_i32, %arg2 : i32, i32, i32, i32
  }
}

</mosaic_0001>

<llo_original>
// kernel: basic_conv2d.1
$region0: #{basic_conv2d.1}
  #allocation0 [shape = 'u32[]', space=smem, size = 0x4, offset = 0x4, fixed_abs, tag = 'smem constant byte address 0x4 - core index']
  #allocation1 [shape = 'u32[144,128]{1,0:T(1,128)}', space=vmem, size = 0x12000, scoped, tag = 'internal scratch']
  %s0 = inlined_call_operand.vmem [shape: bf16[2,18,18,4], index: 0, kind: input, shape index: {}]
  %s1 = inlined_call_operand.vmem [shape: bf16[36,128], index: 1, kind: input, shape index: {}]
  %s2 = inlined_call_operand.vmem [shape: f32[1,128], index: 2, kind: input, shape index: {}]
  %s3 = inlined_call_operand.vmem [shape: bf16[2,16,16,128], index: 3, kind: output, shape index: {}]
  %s4 = sld [smem:[#allocation0]]
  $region45: #{basic_conv2d.1} parent=0
    _
  %s6 = ssub.s32 1, %s4
  %s7 = scalar_select 0, %s6, %s4
  loop: start=0, step=1, limit=4
  $region2: #{basic_conv2d.1} parent=0 // loop_pre_header
    _
  $region3: #{basic_conv2d.1} parent=0 // loop_header
    %s9 = sphi 0, %s13
    %p10 = scmp.ge.s32.totalorder %s9, 4
    %s16 = sphi 0, %s35
    %s17 = sphi 0, %s31
    %s18 = sphi 0, %s27
    %s19 = sphi 0, %s16
    %s20 = sphi 0, %s17
    %s21 = sphi 0, %s18
    %s22 = sphi 0, %s19
    %s23 = sphi 0, %s20
    %s24 = sphi 0, %s21
    %s38 = sphi 0, %s40
    %s41 = sphi 0, %s38
    %s42 = sphi 0, %s41
    %s58 = sphi 0, %s42
    %s64 = sphi 0, %s66
    %s67 = sphi 0, %s64
    %s68 = sphi 0, %s67
    %s84 = sphi 0, %s68
    %s90 = sphi 0, %s92
    %s93 = sphi 0, %s90
    %s94 = sphi 0, %s93
    %s110 = sphi 0, %s94
    %s120 = sphi 0, %s122
    %s123 = sphi 0, %s120
    %s124 = sphi 0, %s123
    %s140 = sphi 0, %s124
  $region4: #{basic_conv2d.1} parent=0 // loop_header_branch
    %12 = sbr.rel (%p10) target = $region8
  $region5: #{basic_conv2d.1} parent=0 // loop_body
    %s14 = ssub.s32 %s9, 1
    %s15 = ssub.s32 %s9, 2
    %s25 = sadd.s32 1, %s18
    %p26 = scmp.ge.s32.totalorder %s25, 1
    %s27 = scalar_select %p26, 0, %s25
    %s28 = sadd.s32 1, %s17
    %s29 = scalar_select %p26, %s28, %s17
    %p30 = scmp.ge.s32.totalorder %s29, 1
    %s31 = scalar_select %p30, 0, %s29
    %s32 = sadd.s32 1, %s16
    %s33 = scalar_select %p30, %s32, %s16
    %p34 = scmp.ge.s32.totalorder %s33, 2
    %s35 = scalar_select %p34, 0, %s33
    %s36 = ssub.s32 %s16, %s35
    %p37 = scmp.eq.s32.totalorder %s36, 0
    %s39 = sadd.s32 %s38, 1
    %s40 = scalar_select %p37, %s38, %s39
    %p43 = pneg %p37
    %p44 = scmp.eq.s32.totalorder %s9, 1
    %p45 = por %p43, %p44
    %p46 = scmp.ne.s32.totalorder %s38, %s41
    %p47 = scmp.eq.s32.totalorder %s9, 0
    %p48 = por %p46, %p47
    %p49 = scmp.ne.s32.totalorder %s38, %s41
    %p50 = scmp.eq.s32.totalorder %s14, 1
    %p51 = por %p49, %p50
    %p52 = scmp.ne.s32.totalorder %s41, %s42
    %p53 = scmp.eq.s32.totalorder %s14, 0
    %p54 = por %p52, %p53
    %p55 = scmp.ne.s32.totalorder %s41, %s42
    %p56 = scmp.eq.s32.totalorder %s15, 1
    %p57 = por %p55, %p56
    %p59 = scmp.ne.s32.totalorder %s42, %s58
    %p60 = scmp.eq.s32.totalorder %s15, 0
    %p61 = por %p59, %p60
    %s62 = ssub.s32 %s18, %s27
    %p63 = scmp.eq.s32.totalorder %s62, 0
    %s65 = sadd.s32 %s64, 1
    %s66 = scalar_select %p63, %s64, %s65
    %p69 = pneg %p63
    %p70 = scmp.eq.s32.totalorder %s9, 1
    %p71 = por %p69, %p70
    %p72 = scmp.ne.s32.totalorder %s64, %s67
    %p73 = scmp.eq.s32.totalorder %s9, 0
    %p74 = por %p72, %p73
    %p75 = scmp.ne.s32.totalorder %s64, %s67
    %p76 = scmp.eq.s32.totalorder %s14, 1
    %p77 = por %p75, %p76
    %p78 = scmp.ne.s32.totalorder %s67, %s68
    %p79 = scmp.eq.s32.totalorder %s14, 0
    %p80 = por %p78, %p79
    %p81 = scmp.ne.s32.totalorder %s67, %s68
    %p82 = scmp.eq.s32.totalorder %s15, 1
    %p83 = por %p81, %p82
    %p85 = scmp.ne.s32.totalorder %s68, %s84
    %p86 = scmp.eq.s32.totalorder %s15, 0
    %p87 = por %p85, %p86
    %s88 = ssub.s32 %s18, %s27
    %p89 = scmp.eq.s32.totalorder %s88, 0
    %s91 = sadd.s32 %s90, 1
    %s92 = scalar_select %p89, %s90, %s91
    %p95 = pneg %p89
    %p96 = scmp.eq.s32.totalorder %s9, 1
    %p97 = por %p95, %p96
    %p98 = scmp.ne.s32.totalorder %s90, %s93
    %p99 = scmp.eq.s32.totalorder %s9, 0
    %p100 = por %p98, %p99
    %p101 = scmp.ne.s32.totalorder %s90, %s93
    %p102 = scmp.eq.s32.totalorder %s14, 1
    %p103 = por %p101, %p102
    %p104 = scmp.ne.s32.totalorder %s93, %s94
    %p105 = scmp.eq.s32.totalorder %s14, 0
    %p106 = por %p104, %p105
    %p107 = scmp.ne.s32.totalorder %s93, %s94
    %p108 = scmp.eq.s32.totalorder %s15, 1
    %p109 = por %p107, %p108
    %p111 = scmp.ne.s32.totalorder %s94, %s110
    %p112 = scmp.eq.s32.totalorder %s15, 0
    %p113 = por %p111, %p112
    %s114 = ssub.s32 %s16, %s35
    %s115 = ssub.s32 %s17, %s31
    %s116 = sor.u32 %s114, %s115
    %s117 = ssub.s32 %s18, %s27
    %s118 = sor.u32 %s116, %s117
    %p119 = scmp.eq.s32.totalorder %s118, 0
    %s121 = sadd.s32 %s120, 1
    %s122 = scalar_select %p119, %s120, %s121
    %p125 = pneg %p119
    %p126 = scmp.eq.s32.totalorder %s9, 1
    %p127 = por %p125, %p126
    %p128 = scmp.ne.s32.totalorder %s120, %s123
    %p129 = scmp.eq.s32.totalorder %s9, 0
    %p130 = por %p128, %p129
    %p131 = scmp.ne.s32.totalorder %s120, %s123
    %p132 = scmp.eq.s32.totalorder %s14, 1
    %p133 = por %p131, %p132
    %p134 = scmp.ne.s32.totalorder %s123, %s124
    %p135 = scmp.eq.s32.totalorder %s14, 0
    %p136 = por %p134, %p135
    %p137 = scmp.ne.s32.totalorder %s123, %s124
    %p138 = scmp.eq.s32.totalorder %s15, 1
    %p139 = por %p137, %p138
    %p141 = scmp.ne.s32.totalorder %s124, %s140
    %p142 = scmp.eq.s32.totalorder %s15, 0
    %p143 = por %p141, %p142
    %p144 = scmp.le.s32.totalorder 1, %s9
    %p145 = scmp.lt.s32.totalorder %s9, 3
    %p146 = pnand %p144, %p145
    %p147 = pneg %p146
    // Predicated region
    $region9: #{basic_conv2d.1} parent=5 // pred_check
      _
    $region10: #{basic_conv2d.1} parent=5 // pred_check_branch
      %149 = sbr.rel (%p146) target = $region12
    $region11: #{basic_conv2d.1} parent=5 // pred_region
      %s150 = ssub.s32 %s9, 1
      // Predicated region
      $region13: #{basic_conv2d.1} parent=11 // pred_check
        %p151 = pneg %p80
      $region14: #{basic_conv2d.1} parent=11 // pred_check_branch
        %153 = sbr.rel (%p151) target = $region16
      $region15: #{basic_conv2d.1} parent=11 // pred_region
        %p154 = scmp.lt.s32.totalorder %s21, 0
        %s155 = scalar_select %p154, %s21, 0
        %s156 = smul.addr %s155, 4
        %s157 = scalar_lea.vmem %s1, %s156
      $region16: #{basic_conv2d.1} parent=11 // pred_fallthru
        _
      // Predicated region
      $region17: #{basic_conv2d.1} parent=11 // pred_check
        %p158 = pneg %p106
      $region18: #{basic_conv2d.1} parent=11 // pred_check_branch
        %160 = sbr.rel (%p158) target = $region20
      $region19: #{basic_conv2d.1} parent=11 // pred_region
        %p161 = scmp.lt.s32.totalorder %s21, 0
        %s162 = scalar_select %p161, %s21, 0
        %s163 = scalar_lea.vmem %s2, %s162
      $region20: #{basic_conv2d.1} parent=11 // pred_fallthru
        _
    $region12: #{basic_conv2d.1} parent=5 // pred_fallthru
      _
    %p164 = scmp.lt.s32.totalorder %s9, 2
    // Predicated region
    $region21: #{basic_conv2d.1} parent=5 // pred_check
      %p165 = pneg %p164
    $region22: #{basic_conv2d.1} parent=5 // pred_check_branch
      %167 = sbr.rel (%p165) target = $region24
    $region23: #{basic_conv2d.1} parent=5 // pred_region
      // Predicated region
      $region25: #{basic_conv2d.1} parent=23 // pred_check
        %p168 = pneg %p48
      $region26: #{basic_conv2d.1} parent=23 // pred_check_branch
        %170 = sbr.rel (%p168) target = $region28
      $region27: #{basic_conv2d.1} parent=23 // pred_region
        %p171 = scmp.lt.s32.totalorder %s16, 1
        %s172 = scalar_select %p171, %s16, 1
        %s173 = smul.addr %s172, 54
        %s174 = smul.addr %s173, 4
        %s175 = scalar_lea.vmem %s0, %s174
      $region28: #{basic_conv2d.1} parent=23 // pred_fallthru
        _
    $region24: #{basic_conv2d.1} parent=5 // pred_fallthru
      _
    %p176 = scmp.le.s32.totalorder 1, %s9
    %p177 = scmp.lt.s32.totalorder %s9, 3
    %p178 = pnand %p176, %p177
    %p179 = pneg %p178
    // Predicated region
    $region29: #{basic_conv2d.1} parent=5 // pred_check
      _
    $region30: #{basic_conv2d.1} parent=5 // pred_check_branch
      %181 = sbr.rel (%p178) target = $region32
    $region31: #{basic_conv2d.1} parent=5 // pred_region
      %s182 = ssub.s32 %s9, 1
      %p183 = scmp.lt.s32.totalorder %s19, 1
      %s184 = scalar_select %p183, %s19, 1
      %s185 = smul.addr %s184, 54
      %s186 = smul.addr %s185, 4
      %s187 = scalar_lea.vmem %s0, %s186
      %p188 = pneg %p54
      %p189 = pneg %p51
      %p190 = scmp.lt.s32.totalorder %s21, 0
      %s191 = scalar_select %p190, %s21, 0
      %s192 = smul.addr %s191, 4
      %s193 = scalar_lea.vmem %s1, %s192
      %p194 = pneg %p80
      %p195 = pneg %p77
      %p196 = scmp.lt.s32.totalorder %s21, 0
      %s197 = scalar_select %p196, %s21, 0
      %s198 = scalar_lea.vmem %s2, %s197
      %p199 = pneg %p106
      %p200 = pneg %p103
      %p201 = pneg %p136
      %p202 = pneg %p133
      %s203 = smul.u32 16, %s20
      %p204 = scmp.lt.s32.totalorder %s19, 1
      %s205 = scalar_select %p204, %s19, 1
      %p206 = scmp.lt.s32.totalorder %s203, 15
      %s207 = scalar_select %p206, %s203, 15
      %p208 = scmp.lt.s32.totalorder %s21, 0
      %s209 = scalar_select %p208, %s21, 0
      %s210 = smul.addr %s207, 2
      %s211 = sadd.s32 %s209, %s210
      %s212 = smul.addr %s205, 32
      %s213 = sadd.s32 %s211, %s212
      %s214 = smul.addr %s213, 4
      %s215 = scalar_lea.vmem %s3, %s214
      %p216 = scmp.lt.s32.totalorder %s19, 1
      %s217 = scalar_select %p216, %s19, 1
      %s218 = smul.addr %s217, 54
      %s219 = smul.addr %s218, 4
      %s220 = scalar_lea.vmem %s0, %s219
      %p221 = scmp.lt.s32.totalorder %s21, 0
      %s222 = scalar_select %p221, %s21, 0
      %s223 = smul.addr %s222, 4
      %s224 = scalar_lea.vmem %s1, %s223
      %p225 = scmp.lt.s32.totalorder %s21, 0
      %s226 = scalar_select %p225, %s21, 0
      %s227 = scalar_lea.vmem %s2, %s226
      %s228 = smul.u32 16, %s20
      %p229 = scmp.lt.s32.totalorder %s19, 1
      %s230 = scalar_select %p229, %s19, 1
      %p231 = scmp.lt.s32.totalorder %s228, 15
      %s232 = scalar_select %p231, %s228, 15
      %p233 = scmp.lt.s32.totalorder %s21, 0
      %s234 = scalar_select %p233, %s21, 0
      %s235 = smul.addr %s232, 2
      %s236 = sadd.s32 %s234, %s235
      %s237 = smul.addr %s230, 32
      %s238 = sadd.s32 %s236, %s237
      %s239 = smul.addr %s238, 4
      %s240 = scalar_lea.vmem %s3, %s239
      %s241 = smul.u32 16, %s20
      %s243 = smul.u32 %s20, 16
      %s244 = smul.u32 %s243, 3
      %s245 = smul.addr %s244, 4
      %s246 = scalar_lea.vmem %s220, %s245
      %v247 = vld [vmem:[%s246] sm:$0xf]
      %v248 = vld [vmem:[%s246 + $0x4] sm:$0xf]
      %v249 = vld [vmem:[%s246 + $0xc] sm:$0xf]
      %v250 = vld [vmem:[%s246 + $0x10] sm:$0xf]
      %v251 = vld [vmem:[%s246 + $0x18] sm:$0xf]
      %v252 = vld [vmem:[%s246 + $0x1c] sm:$0xf]
      %v253 = vld [vmem:[%s246 + $0x24] sm:$0xf]
      %v254 = vld [vmem:[%s246 + $0x28] sm:$0xf]
      %v255 = vld [vmem:[%s246 + $0x30] sm:$0xf]
      %v256 = vld [vmem:[%s246 + $0x34] sm:$0xf]
      %v257 = vld [vmem:[%s246 + $0x3c] sm:$0xf]
      %v258 = vld [vmem:[%s246 + $0x40] sm:$0xf]
      %v259 = vld [vmem:[%s246 + $0x48] sm:$0xf]
      %v260 = vld [vmem:[%s246 + $0x4c] sm:$0xf]
      %v261 = vld [vmem:[%s246 + $0x54] sm:$0xf]
      %v262 = vld [vmem:[%s246 + $0x58] sm:$0xf]
      %v263 = vld [vmem:[%s246 + $0x60] sm:$0xf]
      %v264 = vld [vmem:[%s246 + $0x64] sm:$0xf]
      %v265 = vld [vmem:[%s246 + $0x6c] sm:$0xf]
      %v266 = vld [vmem:[%s246 + $0x70] sm:$0xf]
      %v267 = vld [vmem:[%s246 + $0x78] sm:$0xf]
      %v268 = vld [vmem:[%s246 + $0x7c] sm:$0xf]
      %v269 = vld [vmem:[%s246 + $0x84] sm:$0xf]
      %v270 = vld [vmem:[%s246 + $0x88] sm:$0xf]
      %v271 = vld [vmem:[%s246 + $0x90] sm:$0xf]
      %v272 = vld [vmem:[%s246 + $0x94] sm:$0xf]
      %v273 = vld [vmem:[%s246 + $0x9c] sm:$0xf]
      %v274 = vld [vmem:[%s246 + $0xa0] sm:$0xf]
      %v275 = vld [vmem:[%s246 + $0xa8] sm:$0xf]
      %v276 = vld [vmem:[%s246 + $0xac] sm:$0xf]
      %v277 = vld [vmem:[%s246 + $0xb4] sm:$0xf]
      %v278 = vld [vmem:[%s246 + $0xb8] sm:$0xf]
      %v279 = vld [vmem:[%s246 + $0x8] sm:$0x1]
      %v280 = vld [vmem:[%s246 + $0x14] sm:$0x1]
      %v281 = vld [vmem:[%s246 + $0x20] sm:$0x1]
      %v282 = vld [vmem:[%s246 + $0x2c] sm:$0x1]
      %v283 = vld [vmem:[%s246 + $0x38] sm:$0x1]
      %v284 = vld [vmem:[%s246 + $0x44] sm:$0x1]
      %v285 = vld [vmem:[%s246 + $0x50] sm:$0x1]
      %v286 = vld [vmem:[%s246 + $0x5c] sm:$0x1]
      %v287 = vld [vmem:[%s246 + $0x68] sm:$0x1]
      %v288 = vld [vmem:[%s246 + $0x74] sm:$0x1]
      %v289 = vld [vmem:[%s246 + $0x80] sm:$0x1]
      %v290 = vld [vmem:[%s246 + $0x8c] sm:$0x1]
      %v291 = vld [vmem:[%s246 + $0x98] sm:$0x1]
      %v292 = vld [vmem:[%s246 + $0xa4] sm:$0x1]
      %v293 = vld [vmem:[%s246 + $0xb0] sm:$0x1]
      %v294 = vld [vmem:[%s246 + $0xbc] sm:$0x1]
      %v295 = vld [vmem:[%s246] sm:$0xe]
      %v296 = vld [vmem:[%s246 + $0xc] sm:$0xe]
      %v297 = vld [vmem:[%s246 + $0x18] sm:$0xe]
      %v298 = vld [vmem:[%s246 + $0x24] sm:$0xe]
      %v299 = vld [vmem:[%s246 + $0x30] sm:$0xe]
      %v300 = vld [vmem:[%s246 + $0x3c] sm:$0xe]
      %v301 = vld [vmem:[%s246 + $0x48] sm:$0xe]
      %v302 = vld [vmem:[%s246 + $0x54] sm:$0xe]
      %v303 = vld [vmem:[%s246 + $0x60] sm:$0xe]
      %v304 = vld [vmem:[%s246 + $0x6c] sm:$0xe]
      %v305 = vld [vmem:[%s246 + $0x78] sm:$0xe]
      %v306 = vld [vmem:[%s246 + $0x84] sm:$0xe]
      %v307 = vld [vmem:[%s246 + $0x90] sm:$0xe]
      %v308 = vld [vmem:[%s246 + $0x9c] sm:$0xe]
      %v309 = vld [vmem:[%s246 + $0xa8] sm:$0xe]
      %v310 = vld [vmem:[%s246 + $0xb4] sm:$0xe]
      %s311 = sadd.s32 %s243, 1
      %s312 = smul.u32 %s311, 3
      %s313 = smul.addr %s312, 4
      %s314 = scalar_lea.vmem %s220, %s313
      %v315 = vld [vmem:[%s314] sm:$0xf]
      %v316 = vld [vmem:[%s314 + $0x4] sm:$0xf]
      %v317 = vld [vmem:[%s314 + $0xc] sm:$0xf]
      %v318 = vld [vmem:[%s314 + $0x10] sm:$0xf]
      %v319 = vld [vmem:[%s314 + $0x18] sm:$0xf]
      %v320 = vld [vmem:[%s314 + $0x1c] sm:$0xf]
      %v321 = vld [vmem:[%s314 + $0x24] sm:$0xf]
      %v322 = vld [vmem:[%s314 + $0x28] sm:$0xf]
      %v323 = vld [vmem:[%s314 + $0x30] sm:$0xf]
      %v324 = vld [vmem:[%s314 + $0x34] sm:$0xf]
      %v325 = vld [vmem:[%s314 + $0x3c] sm:$0xf]
      %v326 = vld [vmem:[%s314 + $0x40] sm:$0xf]
      %v327 = vld [vmem:[%s314 + $0x48] sm:$0xf]
      %v328 = vld [vmem:[%s314 + $0x4c] sm:$0xf]
      %v329 = vld [vmem:[%s314 + $0x54] sm:$0xf]
      %v330 = vld [vmem:[%s314 + $0x58] sm:$0xf]
      %v331 = vld [vmem:[%s314 + $0x60] sm:$0xf]
      %v332 = vld [vmem:[%s314 + $0x64] sm:$0xf]
      %v333 = vld [vmem:[%s314 + $0x6c] sm:$0xf]
      %v334 = vld [vmem:[%s314 + $0x70] sm:$0xf]
      %v335 = vld [vmem:[%s314 + $0x78] sm:$0xf]
      %v336 = vld [vmem:[%s314 + $0x7c] sm:$0xf]
      %v337 = vld [vmem:[%s314 + $0x84] sm:$0xf]
      %v338 = vld [vmem:[%s314 + $0x88] sm:$0xf]
      %v339 = vld [vmem:[%s314 + $0x90] sm:$0xf]
      %v340 = vld [vmem:[%s314 + $0x94] sm:$0xf]
      %v341 = vld [vmem:[%s314 + $0x9c] sm:$0xf]
      %v342 = vld [vmem:[%s314 + $0xa0] sm:$0xf]
      %v343 = vld [vmem:[%s314 + $0xa8] sm:$0xf]
      %v344 = vld [vmem:[%s314 + $0xac] sm:$0xf]
      %v345 = vld [vmem:[%s314 + $0xb4] sm:$0xf]
      %v346 = vld [vmem:[%s314 + $0xb8] sm:$0xf]
      %v347 = vld [vmem:[%s314 + $0x8] sm:$0x1]
      %v348 = vld [vmem:[%s314 + $0x14] sm:$0x1]
      %v349 = vld [vmem:[%s314 + $0x20] sm:$0x1]
      %v350 = vld [vmem:[%s314 + $0x2c] sm:$0x1]
      %v351 = vld [vmem:[%s314 + $0x38] sm:$0x1]
      %v352 = vld [vmem:[%s314 + $0x44] sm:$0x1]
      %v353 = vld [vmem:[%s314 + $0x50] sm:$0x1]
      %v354 = vld [vmem:[%s314 + $0x5c] sm:$0x1]
      %v355 = vld [vmem:[%s314 + $0x68] sm:$0x1]
      %v356 = vld [vmem:[%s314 + $0x74] sm:$0x1]
      %v357 = vld [vmem:[%s314 + $0x80] sm:$0x1]
      %v358 = vld [vmem:[%s314 + $0x8c] sm:$0x1]
      %v359 = vld [vmem:[%s314 + $0x98] sm:$0x1]
      %v360 = vld [vmem:[%s314 + $0xa4] sm:$0x1]
      %v361 = vld [vmem:[%s314 + $0xb0] sm:$0x1]
      %v362 = vld [vmem:[%s314 + $0xbc] sm:$0x1]
      %v363 = vld [vmem:[%s314] sm:$0xe]
      %v364 = vld [vmem:[%s314 + $0xc] sm:$0xe]
      %v365 = vld [vmem:[%s314 + $0x18] sm:$0xe]
      %v366 = vld [vmem:[%s314 + $0x24] sm:$0xe]
      %v367 = vld [vmem:[%s314 + $0x30] sm:$0xe]
      %v368 = vld [vmem:[%s314 + $0x3c] sm:$0xe]
      %v369 = vld [vmem:[%s314 + $0x48] sm:$0xe]
      %v370 = vld [vmem:[%s314 + $0x54] sm:$0xe]
      %v371 = vld [vmem:[%s314 + $0x60] sm:$0xe]
      %v372 = vld [vmem:[%s314 + $0x6c] sm:$0xe]
      %v373 = vld [vmem:[%s314 + $0x78] sm:$0xe]
      %v374 = vld [vmem:[%s314 + $0x84] sm:$0xe]
      %v375 = vld [vmem:[%s314 + $0x90] sm:$0xe]
      %v376 = vld [vmem:[%s314 + $0x9c] sm:$0xe]
      %v377 = vld [vmem:[%s314 + $0xa8] sm:$0xe]
      %v378 = vld [vmem:[%s314 + $0xb4] sm:$0xe]
      %s379 = sadd.s32 %s243, 2
      %s380 = smul.u32 %s379, 3
      %s381 = smul.addr %s380, 4
      %s382 = scalar_lea.vmem %s220, %s381
      %v383 = vld [vmem:[%s382] sm:$0xf]
      %v384 = vld [vmem:[%s382 + $0x4] sm:$0xf]
      %v385 = vld [vmem:[%s382 + $0xc] sm:$0xf]
      %v386 = vld [vmem:[%s382 + $0x10] sm:$0xf]
      %v387 = vld [vmem:[%s382 + $0x18] sm:$0xf]
      %v388 = vld [vmem:[%s382 + $0x1c] sm:$0xf]
      %v389 = vld [vmem:[%s382 + $0x24] sm:$0xf]
      %v390 = vld [vmem:[%s382 + $0x28] sm:$0xf]
      %v391 = vld [vmem:[%s382 + $0x30] sm:$0xf]
      %v392 = vld [vmem:[%s382 + $0x34] sm:$0xf]
      %v393 = vld [vmem:[%s382 + $0x3c] sm:$0xf]
      %v394 = vld [vmem:[%s382 + $0x40] sm:$0xf]
      %v395 = vld [vmem:[%s382 + $0x48] sm:$0xf]
      %v396 = vld [vmem:[%s382 + $0x4c] sm:$0xf]
      %v397 = vld [vmem:[%s382 + $0x54] sm:$0xf]
      %v398 = vld [vmem:[%s382 + $0x58] sm:$0xf]
      %v399 = vld [vmem:[%s382 + $0x60] sm:$0xf]
      %v400 = vld [vmem:[%s382 + $0x64] sm:$0xf]
      %v401 = vld [vmem:[%s382 + $0x6c] sm:$0xf]
      %v402 = vld [vmem:[%s382 + $0x70] sm:$0xf]
      %v403 = vld [vmem:[%s382 + $0x78] sm:$0xf]
      %v404 = vld [vmem:[%s382 + $0x7c] sm:$0xf]
      %v405 = vld [vmem:[%s382 + $0x84] sm:$0xf]
      %v406 = vld [vmem:[%s382 + $0x88] sm:$0xf]
      %v407 = vld [vmem:[%s382 + $0x90] sm:$0xf]
      %v408 = vld [vmem:[%s382 + $0x94] sm:$0xf]
      %v409 = vld [vmem:[%s382 + $0x9c] sm:$0xf]
      %v410 = vld [vmem:[%s382 + $0xa0] sm:$0xf]
      %v411 = vld [vmem:[%s382 + $0xa8] sm:$0xf]
      %v412 = vld [vmem:[%s382 + $0xac] sm:$0xf]
      %v413 = vld [vmem:[%s382 + $0xb4] sm:$0xf]
      %v414 = vld [vmem:[%s382 + $0xb8] sm:$0xf]
      %v415 = vld [vmem:[%s382 + $0x8] sm:$0x1]
      %v416 = vld [vmem:[%s382 + $0x14] sm:$0x1]
      %v417 = vld [vmem:[%s382 + $0x20] sm:$0x1]
      %v418 = vld [vmem:[%s382 + $0x2c] sm:$0x1]
      %v419 = vld [vmem:[%s382 + $0x38] sm:$0x1]
      %v420 = vld [vmem:[%s382 + $0x44] sm:$0x1]
      %v421 = vld [vmem:[%s382 + $0x50] sm:$0x1]
      %v422 = vld [vmem:[%s382 + $0x5c] sm:$0x1]
      %v423 = vld [vmem:[%s382 + $0x68] sm:$0x1]
      %v424 = vld [vmem:[%s382 + $0x74] sm:$0x1]
      %v425 = vld [vmem:[%s382 + $0x80] sm:$0x1]
      %v426 = vld [vmem:[%s382 + $0x8c] sm:$0x1]
      %v427 = vld [vmem:[%s382 + $0x98] sm:$0x1]
      %v428 = vld [vmem:[%s382 + $0xa4] sm:$0x1]
      %v429 = vld [vmem:[%s382 + $0xb0] sm:$0x1]
      %v430 = vld [vmem:[%s382 + $0xbc] sm:$0x1]
      %v431 = vld [vmem:[%s382] sm:$0xe]
      %v432 = vld [vmem:[%s382 + $0xc] sm:$0xe]
      %v433 = vld [vmem:[%s382 + $0x18] sm:$0xe]
      %v434 = vld [vmem:[%s382 + $0x24] sm:$0xe]
      %v435 = vld [vmem:[%s382 + $0x30] sm:$0xe]
      %v436 = vld [vmem:[%s382 + $0x3c] sm:$0xe]
      %v437 = vld [vmem:[%s382 + $0x48] sm:$0xe]
      %v438 = vld [vmem:[%s382 + $0x54] sm:$0xe]
      %v439 = vld [vmem:[%s382 + $0x60] sm:$0xe]
      %v440 = vld [vmem:[%s382 + $0x6c] sm:$0xe]
      %v441 = vld [vmem:[%s382 + $0x78] sm:$0xe]
      %v442 = vld [vmem:[%s382 + $0x84] sm:$0xe]
      %v443 = vld [vmem:[%s382 + $0x90] sm:$0xe]
      %v444 = vld [vmem:[%s382 + $0x9c] sm:$0xe]
      %v445 = vld [vmem:[%s382 + $0xa8] sm:$0xe]
      %v446 = vld [vmem:[%s382 + $0xb4] sm:$0xe]
      %v479 = vunpack.c.l.b16 %v247
      %v480 = vunpack.c.l.b16 %v248
      %v481 = vunpack.c.l.b16 %v249
      %v482 = vunpack.c.l.b16 %v250
      %v483 = vunpack.c.l.b16 %v251
      %v484 = vunpack.c.l.b16 %v252
      %v485 = vunpack.c.l.b16 %v253
      %v486 = vunpack.c.l.b16 %v254
      %v487 = vunpack.c.l.b16 %v255
      %v488 = vunpack.c.l.b16 %v256
      %v489 = vunpack.c.l.b16 %v257
      %v490 = vunpack.c.l.b16 %v258
      %v491 = vunpack.c.l.b16 %v259
      %v492 = vunpack.c.l.b16 %v260
      %v493 = vunpack.c.l.b16 %v261
      %v494 = vunpack.c.l.b16 %v262
      %v495 = vunpack.c.l.b16 %v263
      %v496 = vunpack.c.l.b16 %v264
      %v497 = vunpack.c.l.b16 %v265
      %v498 = vunpack.c.l.b16 %v266
      %v499 = vunpack.c.l.b16 %v267
      %v500 = vunpack.c.l.b16 %v268
      %v501 = vunpack.c.l.b16 %v269
      %v502 = vunpack.c.l.b16 %v270
      %v503 = vunpack.c.l.b16 %v271
      %v504 = vunpack.c.l.b16 %v272
      %v505 = vunpack.c.l.b16 %v273
      %v506 = vunpack.c.l.b16 %v274
      %v507 = vunpack.c.l.b16 %v275
      %v508 = vunpack.c.l.b16 %v276
      %v509 = vunpack.c.l.b16 %v277
      %v510 = vunpack.c.l.b16 %v278
      %v511 = vpack.c.b16 %v480, %v479
      %v512 = vpack.c.b16 %v482, %v481
      %v513 = vpack.c.b16 %v484, %v483
      %v514 = vpack.c.b16 %v486, %v485
      %v515 = vpack.c.b16 %v488, %v487
      %v516 = vpack.c.b16 %v490, %v489
      %v517 = vpack.c.b16 %v492, %v491
      %v518 = vpack.c.b16 %v494, %v493
      %v519 = vpack.c.b16 %v496, %v495
      %v520 = vpack.c.b16 %v498, %v497
      %v521 = vpack.c.b16 %v500, %v499
      %v522 = vpack.c.b16 %v502, %v501
      %v523 = vpack.c.b16 %v504, %v503
      %v524 = vpack.c.b16 %v506, %v505
      %v525 = vpack.c.b16 %v508, %v507
      %v526 = vpack.c.b16 %v510, %v509
      %v543 = vunpack.c.l.b16 %v279
      %v544 = vunpack.c.l.b16 %v280
      %v545 = vunpack.c.l.b16 %v281
      %v546 = vunpack.c.l.b16 %v282
      %v547 = vunpack.c.l.b16 %v283
      %v548 = vunpack.c.l.b16 %v284
      %v549 = vunpack.c.l.b16 %v285
      %v550 = vunpack.c.l.b16 %v286
      %v551 = vunpack.c.l.b16 %v287
      %v552 = vunpack.c.l.b16 %v288
      %v553 = vunpack.c.l.b16 %v289
      %v554 = vunpack.c.l.b16 %v290
      %v555 = vunpack.c.l.b16 %v291
      %v556 = vunpack.c.l.b16 %v292
      %v557 = vunpack.c.l.b16 %v293
      %v558 = vunpack.c.l.b16 %v294
      %v559 = vpack.c.b16 %v543, %v543
      %v560 = vpack.c.b16 %v544, %v544
      %v561 = vpack.c.b16 %v545, %v545
      %v562 = vpack.c.b16 %v546, %v546
      %v563 = vpack.c.b16 %v547, %v547
      %v564 = vpack.c.b16 %v548, %v548
      %v565 = vpack.c.b16 %v549, %v549
      %v566 = vpack.c.b16 %v550, %v550
      %v567 = vpack.c.b16 %v551, %v551
      %v568 = vpack.c.b16 %v552, %v552
      %v569 = vpack.c.b16 %v553, %v553
      %v570 = vpack.c.b16 %v554, %v554
      %v571 = vpack.c.b16 %v555, %v555
      %v572 = vpack.c.b16 %v556, %v556
      %v573 = vpack.c.b16 %v557, %v557
      %v574 = vpack.c.b16 %v558, %v558
      %vm575 = vsmask.f32 7424
      %v577 = vshrl.u32 %v511, 16
      %v579 = vshll.u32 %v511, 16
      %v581 = vrot.slane %v579, 1
      %v582 = vor.u32 %v577, %v581
      %v584 = vshll.u32 %v559, 16
      %v586 = vrot.slane %v584, 1
      %v587 = vsel %vm575, %v582, %v586
      %v589 = vshrl.u32 %v512, 16
      %v591 = vshll.u32 %v512, 16
      %v593 = vrot.slane %v591, 1
      %v594 = vor.u32 %v589, %v593
      %v596 = vshll.u32 %v560, 16
      %v598 = vrot.slane %v596, 1
      %v599 = vsel %vm575, %v594, %v598
      %v601 = vshrl.u32 %v513, 16
      %v603 = vshll.u32 %v513, 16
      %v605 = vrot.slane %v603, 1
      %v606 = vor.u32 %v601, %v605
      %v608 = vshll.u32 %v561, 16
      %v610 = vrot.slane %v608, 1
      %v611 = vsel %vm575, %v606, %v610
      %v613 = vshrl.u32 %v514, 16
      %v615 = vshll.u32 %v514, 16
      %v617 = vrot.slane %v615, 1
      %v618 = vor.u32 %v613, %v617
      %v620 = vshll.u32 %v562, 16
      %v622 = vrot.slane %v620, 1
      %v623 = vsel %vm575, %v618, %v622
      %v625 = vshrl.u32 %v515, 16
      %v627 = vshll.u32 %v515, 16
      %v629 = vrot.slane %v627, 1
      %v630 = vor.u32 %v625, %v629
      %v632 = vshll.u32 %v563, 16
      %v634 = vrot.slane %v632, 1
      %v635 = vsel %vm575, %v630, %v634
      %v637 = vshrl.u32 %v516, 16
      %v639 = vshll.u32 %v516, 16
      %v641 = vrot.slane %v639, 1
      %v642 = vor.u32 %v637, %v641
      %v644 = vshll.u32 %v564, 16
      %v646 = vrot.slane %v644, 1
      %v647 = vsel %vm575, %v642, %v646
      %v649 = vshrl.u32 %v517, 16
      %v651 = vshll.u32 %v517, 16
      %v653 = vrot.slane %v651, 1
      %v654 = vor.u32 %v649, %v653
      %v656 = vshll.u32 %v565, 16
      %v658 = vrot.slane %v656, 1
      %v659 = vsel %vm575, %v654, %v658
      %v661 = vshrl.u32 %v518, 16
      %v663 = vshll.u32 %v518, 16
      %v665 = vrot.slane %v663, 1
      %v666 = vor.u32 %v661, %v665
      %v668 = vshll.u32 %v566, 16
      %v670 = vrot.slane %v668, 1
      %v671 = vsel %vm575, %v666, %v670
      %v673 = vshrl.u32 %v519, 16
      %v675 = vshll.u32 %v519, 16
      %v677 = vrot.slane %v675, 1
      %v678 = vor.u32 %v673, %v677
      %v680 = vshll.u32 %v567, 16
      %v682 = vrot.slane %v680, 1
      %v683 = vsel %vm575, %v678, %v682
      %v685 = vshrl.u32 %v520, 16
      %v687 = vshll.u32 %v520, 16
      %v689 = vrot.slane %v687, 1
      %v690 = vor.u32 %v685, %v689
      %v692 = vshll.u32 %v568, 16
      %v694 = vrot.slane %v692, 1
      %v695 = vsel %vm575, %v690, %v694
      %v697 = vshrl.u32 %v521, 16
      %v699 = vshll.u32 %v521, 16
      %v701 = vrot.slane %v699, 1
      %v702 = vor.u32 %v697, %v701
      %v704 = vshll.u32 %v569, 16
      %v706 = vrot.slane %v704, 1
      %v707 = vsel %vm575, %v702, %v706
      %v709 = vshrl.u32 %v522, 16
      %v711 = vshll.u32 %v522, 16
      %v713 = vrot.slane %v711, 1
      %v714 = vor.u32 %v709, %v713
      %v716 = vshll.u32 %v570, 16
      %v718 = vrot.slane %v716, 1
      %v719 = vsel %vm575, %v714, %v718
      %v721 = vshrl.u32 %v523, 16
      %v723 = vshll.u32 %v523, 16
      %v725 = vrot.slane %v723, 1
      %v726 = vor.u32 %v721, %v725
      %v728 = vshll.u32 %v571, 16
      %v730 = vrot.slane %v728, 1
      %v731 = vsel %vm575, %v726, %v730
      %v733 = vshrl.u32 %v524, 16
      %v735 = vshll.u32 %v524, 16
      %v737 = vrot.slane %v735, 1
      %v738 = vor.u32 %v733, %v737
      %v740 = vshll.u32 %v572, 16
      %v742 = vrot.slane %v740, 1
      %v743 = vsel %vm575, %v738, %v742
      %v745 = vshrl.u32 %v525, 16
      %v747 = vshll.u32 %v525, 16
      %v749 = vrot.slane %v747, 1
      %v750 = vor.u32 %v745, %v749
      %v752 = vshll.u32 %v573, 16
      %v754 = vrot.slane %v752, 1
      %v755 = vsel %vm575, %v750, %v754
      %v757 = vshrl.u32 %v526, 16
      %v759 = vshll.u32 %v526, 16
      %v761 = vrot.slane %v759, 1
      %v762 = vor.u32 %v757, %v761
      %v764 = vshll.u32 %v574, 16
      %v766 = vrot.slane %v764, 1
      %v767 = vsel %vm575, %v762, %v766
      %768 = vrot.lane.b32.xlu0 %v587, 4
      %v769 = vpop.permute.xlu0 %768
      %770 = vrot.lane.b32.xlu0 %v599, 4
      %v771 = vpop.permute.xlu0 %770
      %772 = vrot.lane.b32.xlu0 %v611, 4
      %v773 = vpop.permute.xlu0 %772
      %774 = vrot.lane.b32.xlu0 %v623, 4
      %v775 = vpop.permute.xlu0 %774
      %776 = vrot.lane.b32.xlu0 %v635, 4
      %v777 = vpop.permute.xlu0 %776
      %778 = vrot.lane.b32.xlu0 %v647, 4
      %v779 = vpop.permute.xlu0 %778
      %780 = vrot.lane.b32.xlu0 %v659, 4
      %v781 = vpop.permute.xlu0 %780
      %782 = vrot.lane.b32.xlu0 %v671, 4
      %v783 = vpop.permute.xlu0 %782
      %784 = vrot.lane.b32.xlu0 %v683, 4
      %v785 = vpop.permute.xlu0 %784
      %786 = vrot.lane.b32.xlu0 %v695, 4
      %v787 = vpop.permute.xlu0 %786
      %788 = vrot.lane.b32.xlu0 %v707, 4
      %v789 = vpop.permute.xlu0 %788
      %790 = vrot.lane.b32.xlu0 %v719, 4
      %v791 = vpop.permute.xlu0 %790
      %792 = vrot.lane.b32.xlu0 %v731, 4
      %v793 = vpop.permute.xlu0 %792
      %794 = vrot.lane.b32.xlu0 %v743, 4
      %v795 = vpop.permute.xlu0 %794
      %796 = vrot.lane.b32.xlu0 %v755, 4
      %v797 = vpop.permute.xlu0 %796
      %798 = vrot.lane.b32.xlu0 %v767, 4
      %v799 = vpop.permute.xlu0 %798
      %v816 = vunpack.c.l.b16 %v295
      %v817 = vunpack.c.l.b16 %v296
      %v818 = vunpack.c.l.b16 %v297
      %v819 = vunpack.c.l.b16 %v298
      %v820 = vunpack.c.l.b16 %v299
      %v821 = vunpack.c.l.b16 %v300
      %v822 = vunpack.c.l.b16 %v301
      %v823 = vunpack.c.l.b16 %v302
      %v824 = vunpack.c.l.b16 %v303
      %v825 = vunpack.c.l.b16 %v304
      %v826 = vunpack.c.l.b16 %v305
      %v827 = vunpack.c.l.b16 %v306
      %v828 = vunpack.c.l.b16 %v307
      %v829 = vunpack.c.l.b16 %v308
      %v830 = vunpack.c.l.b16 %v309
      %v831 = vunpack.c.l.b16 %v310
      %v832 = vpack.c.b16 %v480, %v816
      %v833 = vpack.c.b16 %v482, %v817
      %v834 = vpack.c.b16 %v484, %v818
      %v835 = vpack.c.b16 %v486, %v819
      %v836 = vpack.c.b16 %v488, %v820
      %v837 = vpack.c.b16 %v490, %v821
      %v838 = vpack.c.b16 %v492, %v822
      %v839 = vpack.c.b16 %v494, %v823
      %v840 = vpack.c.b16 %v496, %v824
      %v841 = vpack.c.b16 %v498, %v825
      %v842 = vpack.c.b16 %v500, %v826
      %v843 = vpack.c.b16 %v502, %v827
      %v844 = vpack.c.b16 %v504, %v828
      %v845 = vpack.c.b16 %v506, %v829
      %v846 = vpack.c.b16 %v508, %v830
      %v847 = vpack.c.b16 %v510, %v831
      %vm848 = vcmask 1046528
      %v849 = vrot.slane %v832, 1
      %v850 = vrot.slane %v559, 1
      %v851 = vsel %vm848, %v849, %v850
      %v852 = vrot.slane %v833, 1
      %v853 = vrot.slane %v560, 1
      %v854 = vsel %vm848, %v852, %v853
      %v855 = vrot.slane %v834, 1
      %v856 = vrot.slane %v561, 1
      %v857 = vsel %vm848, %v855, %v856
      %v858 = vrot.slane %v835, 1
      %v859 = vrot.slane %v562, 1
      %v860 = vsel %vm848, %v858, %v859
      %v861 = vrot.slane %v836, 1
      %v862 = vrot.slane %v563, 1
      %v863 = vsel %vm848, %v861, %v862
      %v864 = vrot.slane %v837, 1
      %v865 = vrot.slane %v564, 1
      %v866 = vsel %vm848, %v864, %v865
      %v867 = vrot.slane %v838, 1
      %v868 = vrot.slane %v565, 1
      %v869 = vsel %vm848, %v867, %v868
      %v870 = vrot.slane %v839, 1
      %v871 = vrot.slane %v566, 1
      %v872 = vsel %vm848, %v870, %v871
      %v873 = vrot.slane %v840, 1
      %v874 = vrot.slane %v567, 1
      %v875 = vsel %vm848, %v873, %v874
      %v876 = vrot.slane %v841, 1
      %v877 = vrot.slane %v568, 1
      %v878 = vsel %vm848, %v876, %v877
      %v879 = vrot.slane %v842, 1
      %v880 = vrot.slane %v569, 1
      %v881 = vsel %vm848, %v879, %v880
      %v882 = vrot.slane %v843, 1
      %v883 = vrot.slane %v570, 1
      %v884 = vsel %vm848, %v882, %v883
      %v885 = vrot.slane %v844, 1
      %v886 = vrot.slane %v571, 1
      %v887 = vsel %vm848, %v885, %v886
      %v888 = vrot.slane %v845, 1
      %v889 = vrot.slane %v572, 1
      %v890 = vsel %vm848, %v888, %v889
      %v891 = vrot.slane %v846, 1
      %v892 = vrot.slane %v573, 1
      %v893 = vsel %vm848, %v891, %v892
      %v894 = vrot.slane %v847, 1
      %v895 = vrot.slane %v574, 1
      %v896 = vsel %vm848, %v894, %v895
      %897 = vrot.lane.b32.xlu0 %v851, 8
      %v898 = vpop.permute.xlu0 %897
      %899 = vrot.lane.b32.xlu0 %v854, 8
      %v900 = vpop.permute.xlu0 %899
      %901 = vrot.lane.b32.xlu0 %v857, 8
      %v902 = vpop.permute.xlu0 %901
      %903 = vrot.lane.b32.xlu0 %v860, 8
      %v904 = vpop.permute.xlu0 %903
      %905 = vrot.lane.b32.xlu0 %v863, 8
      %v906 = vpop.permute.xlu0 %905
      %907 = vrot.lane.b32.xlu0 %v866, 8
      %v908 = vpop.permute.xlu0 %907
      %909 = vrot.lane.b32.xlu0 %v869, 8
      %v910 = vpop.permute.xlu0 %909
      %911 = vrot.lane.b32.xlu0 %v872, 8
      %v912 = vpop.permute.xlu0 %911
      %913 = vrot.lane.b32.xlu0 %v875, 8
      %v914 = vpop.permute.xlu0 %913
      %915 = vrot.lane.b32.xlu0 %v878, 8
      %v916 = vpop.permute.xlu0 %915
      %917 = vrot.lane.b32.xlu0 %v881, 8
      %v918 = vpop.permute.xlu0 %917
      %919 = vrot.lane.b32.xlu0 %v884, 8
      %v920 = vpop.permute.xlu0 %919
      %921 = vrot.lane.b32.xlu0 %v887, 8
      %v922 = vpop.permute.xlu0 %921
      %923 = vrot.lane.b32.xlu0 %v890, 8
      %v924 = vpop.permute.xlu0 %923
      %925 = vrot.lane.b32.xlu0 %v893, 8
      %v926 = vpop.permute.xlu0 %925
      %927 = vrot.lane.b32.xlu0 %v896, 8
      %v928 = vpop.permute.xlu0 %927
      %v961 = vunpack.c.l.b16 %v315
      %v962 = vunpack.c.l.b16 %v316
      %v963 = vunpack.c.l.b16 %v317
      %v964 = vunpack.c.l.b16 %v318
      %v965 = vunpack.c.l.b16 %v319
      %v966 = vunpack.c.l.b16 %v320
      %v967 = vunpack.c.l.b16 %v321
      %v968 = vunpack.c.l.b16 %v322
      %v969 = vunpack.c.l.b16 %v323
      %v970 = vunpack.c.l.b16 %v324
      %v971 = vunpack.c.l.b16 %v325
      %v972 = vunpack.c.l.b16 %v326
      %v973 = vunpack.c.l.b16 %v327
      %v974 = vunpack.c.l.b16 %v328
      %v975 = vunpack.c.l.b16 %v329
      %v976 = vunpack.c.l.b16 %v330
      %v977 = vunpack.c.l.b16 %v331
      %v978 = vunpack.c.l.b16 %v332
      %v979 = vunpack.c.l.b16 %v333
      %v980 = vunpack.c.l.b16 %v334
      %v981 = vunpack.c.l.b16 %v335
      %v982 = vunpack.c.l.b16 %v336
      %v983 = vunpack.c.l.b16 %v337
      %v984 = vunpack.c.l.b16 %v338
      %v985 = vunpack.c.l.b16 %v339
      %v986 = vunpack.c.l.b16 %v340
      %v987 = vunpack.c.l.b16 %v341
      %v988 = vunpack.c.l.b16 %v342
      %v989 = vunpack.c.l.b16 %v343
      %v990 = vunpack.c.l.b16 %v344
      %v991 = vunpack.c.l.b16 %v345
      %v992 = vunpack.c.l.b16 %v346
      %v993 = vpack.c.b16 %v962, %v961
      %v994 = vpack.c.b16 %v964, %v963
      %v995 = vpack.c.b16 %v966, %v965
      %v996 = vpack.c.b16 %v968, %v967
      %v997 = vpack.c.b16 %v970, %v969
      %v998 = vpack.c.b16 %v972, %v971
      %v999 = vpack.c.b16 %v974, %v973
      %v1000 = vpack.c.b16 %v976, %v975
      %v1001 = vpack.c.b16 %v978, %v977
      %v1002 = vpack.c.b16 %v980, %v979
      %v1003 = vpack.c.b16 %v982, %v981
      %v1004 = vpack.c.b16 %v984, %v983
      %v1005 = vpack.c.b16 %v986, %v985
      %v1006 = vpack.c.b16 %v988, %v987
      %v1007 = vpack.c.b16 %v990, %v989
      %v1008 = vpack.c.b16 %v992, %v991
      %1009 = vrot.lane.b32.xlu0 %v993, 12
      %v1010 = vpop.permute.xlu0 %1009
      %1011 = vrot.lane.b32.xlu0 %v994, 12
      %v1012 = vpop.permute.xlu0 %1011
      %1013 = vrot.lane.b32.xlu0 %v995, 12
      %v1014 = vpop.permute.xlu0 %1013
      %1015 = vrot.lane.b32.xlu0 %v996, 12
      %v1016 = vpop.permute.xlu0 %1015
      %1017 = vrot.lane.b32.xlu0 %v997, 12
      %v1018 = vpop.permute.xlu0 %1017
      %1019 = vrot.lane.b32.xlu0 %v998, 12
      %v1020 = vpop.permute.xlu0 %1019
      %1021 = vrot.lane.b32.xlu0 %v999, 12
      %v1022 = vpop.permute.xlu0 %1021
      %1023 = vrot.lane.b32.xlu0 %v1000, 12
      %v1024 = vpop.permute.xlu0 %1023
      %1025 = vrot.lane.b32.xlu0 %v1001, 12
      %v1026 = vpop.permute.xlu0 %1025
      %1027 = vrot.lane.b32.xlu0 %v1002, 12
      %v1028 = vpop.permute.xlu0 %1027
      %1029 = vrot.lane.b32.xlu0 %v1003, 12
      %v1030 = vpop.permute.xlu0 %1029
      %1031 = vrot.lane.b32.xlu0 %v1004, 12
      %v1032 = vpop.permute.xlu0 %1031
      %1033 = vrot.lane.b32.xlu0 %v1005, 12
      %v1034 = vpop.permute.xlu0 %1033
      %1035 = vrot.lane.b32.xlu0 %v1006, 12
      %v1036 = vpop.permute.xlu0 %1035
      %1037 = vrot.lane.b32.xlu0 %v1007, 12
      %v1038 = vpop.permute.xlu0 %1037
      %1039 = vrot.lane.b32.xlu0 %v1008, 12
      %v1040 = vpop.permute.xlu0 %1039
      %v1057 = vunpack.c.l.b16 %v347
      %v1058 = vunpack.c.l.b16 %v348
      %v1059 = vunpack.c.l.b16 %v349
      %v1060 = vunpack.c.l.b16 %v350
      %v1061 = vunpack.c.l.b16 %v351
      %v1062 = vunpack.c.l.b16 %v352
      %v1063 = vunpack.c.l.b16 %v353
      %v1064 = vunpack.c.l.b16 %v354
      %v1065 = vunpack.c.l.b16 %v355
      %v1066 = vunpack.c.l.b16 %v356
      %v1067 = vunpack.c.l.b16 %v357
      %v1068 = vunpack.c.l.b16 %v358
      %v1069 = vunpack.c.l.b16 %v359
      %v1070 = vunpack.c.l.b16 %v360
      %v1071 = vunpack.c.l.b16 %v361
      %v1072 = vunpack.c.l.b16 %v362
      %v1073 = vpack.c.b16 %v1057, %v1057
      %v1074 = vpack.c.b16 %v1058, %v1058
      %v1075 = vpack.c.b16 %v1059, %v1059
      %v1076 = vpack.c.b16 %v1060, %v1060
      %v1077 = vpack.c.b16 %v1061, %v1061
      %v1078 = vpack.c.b16 %v1062, %v1062
      %v1079 = vpack.c.b16 %v1063, %v1063
      %v1080 = vpack.c.b16 %v1064, %v1064
      %v1081 = vpack.c.b16 %v1065, %v1065
      %v1082 = vpack.c.b16 %v1066, %v1066
      %v1083 = vpack.c.b16 %v1067, %v1067
      %v1084 = vpack.c.b16 %v1068, %v1068
      %v1085 = vpack.c.b16 %v1069, %v1069
      %v1086 = vpack.c.b16 %v1070, %v1070
      %v1087 = vpack.c.b16 %v1071, %v1071
      %v1088 = vpack.c.b16 %v1072, %v1072
      %v1090 = vshrl.u32 %v993, 16
      %v1092 = vshll.u32 %v993, 16
      %v1094 = vrot.slane %v1092, 1
      %v1095 = vor.u32 %v1090, %v1094
      %v1097 = vshll.u32 %v1073, 16
      %v1099 = vrot.slane %v1097, 1
      %v1100 = vsel %vm575, %v1095, %v1099
      %v1102 = vshrl.u32 %v994, 16
      %v1104 = vshll.u32 %v994, 16
      %v1106 = vrot.slane %v1104, 1
      %v1107 = vor.u32 %v1102, %v1106
      %v1109 = vshll.u32 %v1074, 16
      %v1111 = vrot.slane %v1109, 1
      %v1112 = vsel %vm575, %v1107, %v1111
      %v1114 = vshrl.u32 %v995, 16
      %v1116 = vshll.u32 %v995, 16
      %v1118 = vrot.slane %v1116, 1
      %v1119 = vor.u32 %v1114, %v1118
      %v1121 = vshll.u32 %v1075, 16
      %v1123 = vrot.slane %v1121, 1
      %v1124 = vsel %vm575, %v1119, %v1123
      %v1126 = vshrl.u32 %v996, 16
      %v1128 = vshll.u32 %v996, 16
      %v1130 = vrot.slane %v1128, 1
      %v1131 = vor.u32 %v1126, %v1130
      %v1133 = vshll.u32 %v1076, 16
      %v1135 = vrot.slane %v1133, 1
      %v1136 = vsel %vm575, %v1131, %v1135
      %v1138 = vshrl.u32 %v997, 16
      %v1140 = vshll.u32 %v997, 16
      %v1142 = vrot.slane %v1140, 1
      %v1143 = vor.u32 %v1138, %v1142
      %v1145 = vshll.u32 %v1077, 16
      %v1147 = vrot.slane %v1145, 1
      %v1148 = vsel %vm575, %v1143, %v1147
      %v1150 = vshrl.u32 %v998, 16
      %v1152 = vshll.u32 %v998, 16
      %v1154 = vrot.slane %v1152, 1
      %v1155 = vor.u32 %v1150, %v1154
      %v1157 = vshll.u32 %v1078, 16
      %v1159 = vrot.slane %v1157, 1
      %v1160 = vsel %vm575, %v1155, %v1159
      %v1162 = vshrl.u32 %v999, 16
      %v1164 = vshll.u32 %v999, 16
      %v1166 = vrot.slane %v1164, 1
      %v1167 = vor.u32 %v1162, %v1166
      %v1169 = vshll.u32 %v1079, 16
      %v1171 = vrot.slane %v1169, 1
      %v1172 = vsel %vm575, %v1167, %v1171
      %v1174 = vshrl.u32 %v1000, 16
      %v1176 = vshll.u32 %v1000, 16
      %v1178 = vrot.slane %v1176, 1
      %v1179 = vor.u32 %v1174, %v1178
      %v1181 = vshll.u32 %v1080, 16
      %v1183 = vrot.slane %v1181, 1
      %v1184 = vsel %vm575, %v1179, %v1183
      %v1186 = vshrl.u32 %v1001, 16
      %v1188 = vshll.u32 %v1001, 16
      %v1190 = vrot.slane %v1188, 1
      %v1191 = vor.u32 %v1186, %v1190
      %v1193 = vshll.u32 %v1081, 16
      %v1195 = vrot.slane %v1193, 1
      %v1196 = vsel %vm575, %v1191, %v1195
      %v1198 = vshrl.u32 %v1002, 16
      %v1200 = vshll.u32 %v1002, 16
      %v1202 = vrot.slane %v1200, 1
      %v1203 = vor.u32 %v1198, %v1202
      %v1205 = vshll.u32 %v1082, 16
      %v1207 = vrot.slane %v1205, 1
      %v1208 = vsel %vm575, %v1203, %v1207
      %v1210 = vshrl.u32 %v1003, 16
      %v1212 = vshll.u32 %v1003, 16
      %v1214 = vrot.slane %v1212, 1
      %v1215 = vor.u32 %v1210, %v1214
      %v1217 = vshll.u32 %v1083, 16
      %v1219 = vrot.slane %v1217, 1
      %v1220 = vsel %vm575, %v1215, %v1219
      %v1222 = vshrl.u32 %v1004, 16
      %v1224 = vshll.u32 %v1004, 16
      %v1226 = vrot.slane %v1224, 1
      %v1227 = vor.u32 %v1222, %v1226
      %v1229 = vshll.u32 %v1084, 16
      %v1231 = vrot.slane %v1229, 1
      %v1232 = vsel %vm575, %v1227, %v1231
      %v1234 = vshrl.u32 %v1005, 16
      %v1236 = vshll.u32 %v1005, 16
      %v1238 = vrot.slane %v1236, 1
      %v1239 = vor.u32 %v1234, %v1238
      %v1241 = vshll.u32 %v1085, 16
      %v1243 = vrot.slane %v1241, 1
      %v1244 = vsel %vm575, %v1239, %v1243
      %v1246 = vshrl.u32 %v1006, 16
      %v1248 = vshll.u32 %v1006, 16
      %v1250 = vrot.slane %v1248, 1
      %v1251 = vor.u32 %v1246, %v1250
      %v1253 = vshll.u32 %v1086, 16
      %v1255 = vrot.slane %v1253, 1
      %v1256 = vsel %vm575, %v1251, %v1255
      %v1258 = vshrl.u32 %v1007, 16
      %v1260 = vshll.u32 %v1007, 16
      %v1262 = vrot.slane %v1260, 1
      %v1263 = vor.u32 %v1258, %v1262
      %v1265 = vshll.u32 %v1087, 16
      %v1267 = vrot.slane %v1265, 1
      %v1268 = vsel %vm575, %v1263, %v1267
      %v1270 = vshrl.u32 %v1008, 16
      %v1272 = vshll.u32 %v1008, 16
      %v1274 = vrot.slane %v1272, 1
      %v1275 = vor.u32 %v1270, %v1274
      %v1277 = vshll.u32 %v1088, 16
      %v1279 = vrot.slane %v1277, 1
      %v1280 = vsel %vm575, %v1275, %v1279
      %1281 = vrot.lane.b32.xlu0 %v1100, 16
      %v1282 = vpop.permute.xlu0 %1281
      %1283 = vrot.lane.b32.xlu0 %v1112, 16
      %v1284 = vpop.permute.xlu0 %1283
      %1285 = vrot.lane.b32.xlu0 %v1124, 16
      %v1286 = vpop.permute.xlu0 %1285
      %1287 = vrot.lane.b32.xlu0 %v1136, 16
      %v1288 = vpop.permute.xlu0 %1287
      %1289 = vrot.lane.b32.xlu0 %v1148, 16
      %v1290 = vpop.permute.xlu0 %1289
      %1291 = vrot.lane.b32.xlu0 %v1160, 16
      %v1292 = vpop.permute.xlu0 %1291
      %1293 = vrot.lane.b32.xlu0 %v1172, 16
      %v1294 = vpop.permute.xlu0 %1293
      %1295 = vrot.lane.b32.xlu0 %v1184, 16
      %v1296 = vpop.permute.xlu0 %1295
      %1297 = vrot.lane.b32.xlu0 %v1196, 16
      %v1298 = vpop.permute.xlu0 %1297
      %1299 = vrot.lane.b32.xlu0 %v1208, 16
      %v1300 = vpop.permute.xlu0 %1299
      %1301 = vrot.lane.b32.xlu0 %v1220, 16
      %v1302 = vpop.permute.xlu0 %1301
      %1303 = vrot.lane.b32.xlu0 %v1232, 16
      %v1304 = vpop.permute.xlu0 %1303
      %1305 = vrot.lane.b32.xlu0 %v1244, 16
      %v1306 = vpop.permute.xlu0 %1305
      %1307 = vrot.lane.b32.xlu0 %v1256, 16
      %v1308 = vpop.permute.xlu0 %1307
      %1309 = vrot.lane.b32.xlu0 %v1268, 16
      %v1310 = vpop.permute.xlu0 %1309
      %1311 = vrot.lane.b32.xlu0 %v1280, 16
      %v1312 = vpop.permute.xlu0 %1311
      %v1329 = vunpack.c.l.b16 %v363
      %v1330 = vunpack.c.l.b16 %v364
      %v1331 = vunpack.c.l.b16 %v365
      %v1332 = vunpack.c.l.b16 %v366
      %v1333 = vunpack.c.l.b16 %v367
      %v1334 = vunpack.c.l.b16 %v368
      %v1335 = vunpack.c.l.b16 %v369
      %v1336 = vunpack.c.l.b16 %v370
      %v1337 = vunpack.c.l.b16 %v371
      %v1338 = vunpack.c.l.b16 %v372
      %v1339 = vunpack.c.l.b16 %v373
      %v1340 = vunpack.c.l.b16 %v374
      %v1341 = vunpack.c.l.b16 %v375
      %v1342 = vunpack.c.l.b16 %v376
      %v1343 = vunpack.c.l.b16 %v377
      %v1344 = vunpack.c.l.b16 %v378
      %v1345 = vpack.c.b16 %v962, %v1329
      %v1346 = vpack.c.b16 %v964, %v1330
      %v1347 = vpack.c.b16 %v966, %v1331
      %v1348 = vpack.c.b16 %v968, %v1332
      %v1349 = vpack.c.b16 %v970, %v1333
      %v1350 = vpack.c.b16 %v972, %v1334
      %v1351 = vpack.c.b16 %v974, %v1335
      %v1352 = vpack.c.b16 %v976, %v1336
      %v1353 = vpack.c.b16 %v978, %v1337
      %v1354 = vpack.c.b16 %v980, %v1338
      %v1355 = vpack.c.b16 %v982, %v1339
      %v1356 = vpack.c.b16 %v984, %v1340
      %v1357 = vpack.c.b16 %v986, %v1341
      %v1358 = vpack.c.b16 %v988, %v1342
      %v1359 = vpack.c.b16 %v990, %v1343
      %v1360 = vpack.c.b16 %v992, %v1344
      %v1361 = vrot.slane %v1345, 1
      %v1362 = vrot.slane %v1073, 1
      %v1363 = vsel %vm848, %v1361, %v1362
      %v1364 = vrot.slane %v1346, 1
      %v1365 = vrot.slane %v1074, 1
      %v1366 = vsel %vm848, %v1364, %v1365
      %v1367 = vrot.slane %v1347, 1
      %v1368 = vrot.slane %v1075, 1
      %v1369 = vsel %vm848, %v1367, %v1368
      %v1370 = vrot.slane %v1348, 1
      %v1371 = vrot.slane %v1076, 1
      %v1372 = vsel %vm848, %v1370, %v1371
      %v1373 = vrot.slane %v1349, 1
      %v1374 = vrot.slane %v1077, 1
      %v1375 = vsel %vm848, %v1373, %v1374
      %v1376 = vrot.slane %v1350, 1
      %v1377 = vrot.slane %v1078, 1
      %v1378 = vsel %vm848, %v1376, %v1377
      %v1379 = vrot.slane %v1351, 1
      %v1380 = vrot.slane %v1079, 1
      %v1381 = vsel %vm848, %v1379, %v1380
      %v1382 = vrot.slane %v1352, 1
      %v1383 = vrot.slane %v1080, 1
      %v1384 = vsel %vm848, %v1382, %v1383
      %v1385 = vrot.slane %v1353, 1
      %v1386 = vrot.slane %v1081, 1
      %v1387 = vsel %vm848, %v1385, %v1386
      %v1388 = vrot.slane %v1354, 1
      %v1389 = vrot.slane %v1082, 1
      %v1390 = vsel %vm848, %v1388, %v1389
      %v1391 = vrot.slane %v1355, 1
      %v1392 = vrot.slane %v1083, 1
      %v1393 = vsel %vm848, %v1391, %v1392
      %v1394 = vrot.slane %v1356, 1
      %v1395 = vrot.slane %v1084, 1
      %v1396 = vsel %vm848, %v1394, %v1395
      %v1397 = vrot.slane %v1357, 1
      %v1398 = vrot.slane %v1085, 1
      %v1399 = vsel %vm848, %v1397, %v1398
      %v1400 = vrot.slane %v1358, 1
      %v1401 = vrot.slane %v1086, 1
      %v1402 = vsel %vm848, %v1400, %v1401
      %v1403 = vrot.slane %v1359, 1
      %v1404 = vrot.slane %v1087, 1
      %v1405 = vsel %vm848, %v1403, %v1404
      %v1406 = vrot.slane %v1360, 1
      %v1407 = vrot.slane %v1088, 1
      %v1408 = vsel %vm848, %v1406, %v1407
      %1409 = vrot.lane.b32.xlu0 %v1363, 20
      %v1410 = vpop.permute.xlu0 %1409
      %1411 = vrot.lane.b32.xlu0 %v1366, 20
      %v1412 = vpop.permute.xlu0 %1411
      %1413 = vrot.lane.b32.xlu0 %v1369, 20
      %v1414 = vpop.permute.xlu0 %1413
      %1415 = vrot.lane.b32.xlu0 %v1372, 20
      %v1416 = vpop.permute.xlu0 %1415
      %1417 = vrot.lane.b32.xlu0 %v1375, 20
      %v1418 = vpop.permute.xlu0 %1417
      %1419 = vrot.lane.b32.xlu0 %v1378, 20
      %v1420 = vpop.permute.xlu0 %1419
      %1421 = vrot.lane.b32.xlu0 %v1381, 20
      %v1422 = vpop.permute.xlu0 %1421
      %1423 = vrot.lane.b32.xlu0 %v1384, 20
      %v1424 = vpop.permute.xlu0 %1423
      %1425 = vrot.lane.b32.xlu0 %v1387, 20
      %v1426 = vpop.permute.xlu0 %1425
      %1427 = vrot.lane.b32.xlu0 %v1390, 20
      %v1428 = vpop.permute.xlu0 %1427
      %1429 = vrot.lane.b32.xlu0 %v1393, 20
      %v1430 = vpop.permute.xlu0 %1429
      %1431 = vrot.lane.b32.xlu0 %v1396, 20
      %v1432 = vpop.permute.xlu0 %1431
      %1433 = vrot.lane.b32.xlu0 %v1399, 20
      %v1434 = vpop.permute.xlu0 %1433
      %1435 = vrot.lane.b32.xlu0 %v1402, 20
      %v1436 = vpop.permute.xlu0 %1435
      %1437 = vrot.lane.b32.xlu0 %v1405, 20
      %v1438 = vpop.permute.xlu0 %1437
      %1439 = vrot.lane.b32.xlu0 %v1408, 20
      %v1440 = vpop.permute.xlu0 %1439
      %v1473 = vunpack.c.l.b16 %v383
      %v1474 = vunpack.c.l.b16 %v384
      %v1475 = vunpack.c.l.b16 %v385
      %v1476 = vunpack.c.l.b16 %v386
      %v1477 = vunpack.c.l.b16 %v387
      %v1478 = vunpack.c.l.b16 %v388
      %v1479 = vunpack.c.l.b16 %v389
      %v1480 = vunpack.c.l.b16 %v390
      %v1481 = vunpack.c.l.b16 %v391
      %v1482 = vunpack.c.l.b16 %v392
      %v1483 = vunpack.c.l.b16 %v393
      %v1484 = vunpack.c.l.b16 %v394
      %v1485 = vunpack.c.l.b16 %v395
      %v1486 = vunpack.c.l.b16 %v396
      %v1487 = vunpack.c.l.b16 %v397
      %v1488 = vunpack.c.l.b16 %v398
      %v1489 = vunpack.c.l.b16 %v399
      %v1490 = vunpack.c.l.b16 %v400
      %v1491 = vunpack.c.l.b16 %v401
      %v1492 = vunpack.c.l.b16 %v402
      %v1493 = vunpack.c.l.b16 %v403
      %v1494 = vunpack.c.l.b16 %v404
      %v1495 = vunpack.c.l.b16 %v405
      %v1496 = vunpack.c.l.b16 %v406
      %v1497 = vunpack.c.l.b16 %v407
      %v1498 = vunpack.c.l.b16 %v408
      %v1499 = vunpack.c.l.b16 %v409
      %v1500 = vunpack.c.l.b16 %v410
      %v1501 = vunpack.c.l.b16 %v411
      %v1502 = vunpack.c.l.b16 %v412
      %v1503 = vunpack.c.l.b16 %v413
      %v1504 = vunpack.c.l.b16 %v414
      %v1505 = vpack.c.b16 %v1474, %v1473
      %v1506 = vpack.c.b16 %v1476, %v1475
      %v1507 = vpack.c.b16 %v1478, %v1477
      %v1508 = vpack.c.b16 %v1480, %v1479
      %v1509 = vpack.c.b16 %v1482, %v1481
      %v1510 = vpack.c.b16 %v1484, %v1483
      %v1511 = vpack.c.b16 %v1486, %v1485
      %v1512 = vpack.c.b16 %v1488, %v1487
      %v1513 = vpack.c.b16 %v1490, %v1489
      %v1514 = vpack.c.b16 %v1492, %v1491
      %v1515 = vpack.c.b16 %v1494, %v1493
      %v1516 = vpack.c.b16 %v1496, %v1495
      %v1517 = vpack.c.b16 %v1498, %v1497
      %v1518 = vpack.c.b16 %v1500, %v1499
      %v1519 = vpack.c.b16 %v1502, %v1501
      %v1520 = vpack.c.b16 %v1504, %v1503
      %1521 = vrot.lane.b32.xlu0 %v1505, 24
      %v1522 = vpop.permute.xlu0 %1521
      %1523 = vrot.lane.b32.xlu0 %v1506, 24
      %v1524 = vpop.permute.xlu0 %1523
      %1525 = vrot.lane.b32.xlu0 %v1507, 24
      %v1526 = vpop.permute.xlu0 %1525
      %1527 = vrot.lane.b32.xlu0 %v1508, 24
      %v1528 = vpop.permute.xlu0 %1527
      %1529 = vrot.lane.b32.xlu0 %v1509, 24
      %v1530 = vpop.permute.xlu0 %1529
      %1531 = vrot.lane.b32.xlu0 %v1510, 24
      %v1532 = vpop.permute.xlu0 %1531
      %1533 = vrot.lane.b32.xlu0 %v1511, 24
      %v1534 = vpop.permute.xlu0 %1533
      %1535 = vrot.lane.b32.xlu0 %v1512, 24
      %v1536 = vpop.permute.xlu0 %1535
      %1537 = vrot.lane.b32.xlu0 %v1513, 24
      %v1538 = vpop.permute.xlu0 %1537
      %1539 = vrot.lane.b32.xlu0 %v1514, 24
      %v1540 = vpop.permute.xlu0 %1539
      %1541 = vrot.lane.b32.xlu0 %v1515, 24
      %v1542 = vpop.permute.xlu0 %1541
      %1543 = vrot.lane.b32.xlu0 %v1516, 24
      %v1544 = vpop.permute.xlu0 %1543
      %1545 = vrot.lane.b32.xlu0 %v1517, 24
      %v1546 = vpop.permute.xlu0 %1545
      %1547 = vrot.lane.b32.xlu0 %v1518, 24
      %v1548 = vpop.permute.xlu0 %1547
      %1549 = vrot.lane.b32.xlu0 %v1519, 24
      %v1550 = vpop.permute.xlu0 %1549
      %1551 = vrot.lane.b32.xlu0 %v1520, 24
      %v1552 = vpop.permute.xlu0 %1551
      %v1569 = vunpack.c.l.b16 %v415
      %v1570 = vunpack.c.l.b16 %v416
      %v1571 = vunpack.c.l.b16 %v417
      %v1572 = vunpack.c.l.b16 %v418
      %v1573 = vunpack.c.l.b16 %v419
      %v1574 = vunpack.c.l.b16 %v420
      %v1575 = vunpack.c.l.b16 %v421
      %v1576 = vunpack.c.l.b16 %v422
      %v1577 = vunpack.c.l.b16 %v423
      %v1578 = vunpack.c.l.b16 %v424
      %v1579 = vunpack.c.l.b16 %v425
      %v1580 = vunpack.c.l.b16 %v426
      %v1581 = vunpack.c.l.b16 %v427
      %v1582 = vunpack.c.l.b16 %v428
      %v1583 = vunpack.c.l.b16 %v429
      %v1584 = vunpack.c.l.b16 %v430
      %v1585 = vpack.c.b16 %v1569, %v1569
      %v1586 = vpack.c.b16 %v1570, %v1570
      %v1587 = vpack.c.b16 %v1571, %v1571
      %v1588 = vpack.c.b16 %v1572, %v1572
      %v1589 = vpack.c.b16 %v1573, %v1573
      %v1590 = vpack.c.b16 %v1574, %v1574
      %v1591 = vpack.c.b16 %v1575, %v1575
      %v1592 = vpack.c.b16 %v1576, %v1576
      %v1593 = vpack.c.b16 %v1577, %v1577
      %v1594 = vpack.c.b16 %v1578, %v1578
      %v1595 = vpack.c.b16 %v1579, %v1579
      %v1596 = vpack.c.b16 %v1580, %v1580
      %v1597 = vpack.c.b16 %v1581, %v1581
      %v1598 = vpack.c.b16 %v1582, %v1582
      %v1599 = vpack.c.b16 %v1583, %v1583
      %v1600 = vpack.c.b16 %v1584, %v1584
      %v1602 = vshrl.u32 %v1505, 16
      %v1604 = vshll.u32 %v1505, 16
      %v1606 = vrot.slane %v1604, 1
      %v1607 = vor.u32 %v1602, %v1606
      %v1609 = vshll.u32 %v1585, 16
      %v1611 = vrot.slane %v1609, 1
      %v1612 = vsel %vm575, %v1607, %v1611
      %v1614 = vshrl.u32 %v1506, 16
      %v1616 = vshll.u32 %v1506, 16
      %v1618 = vrot.slane %v1616, 1
      %v1619 = vor.u32 %v1614, %v1618
      %v1621 = vshll.u32 %v1586, 16
      %v1623 = vrot.slane %v1621, 1
      %v1624 = vsel %vm575, %v1619, %v1623
      %v1626 = vshrl.u32 %v1507, 16
      %v1628 = vshll.u32 %v1507, 16
      %v1630 = vrot.slane %v1628, 1
      %v1631 = vor.u32 %v1626, %v1630
      %v1633 = vshll.u32 %v1587, 16
      %v1635 = vrot.slane %v1633, 1
      %v1636 = vsel %vm575, %v1631, %v1635
      %v1638 = vshrl.u32 %v1508, 16
      %v1640 = vshll.u32 %v1508, 16
      %v1642 = vrot.slane %v1640, 1
      %v1643 = vor.u32 %v1638, %v1642
      %v1645 = vshll.u32 %v1588, 16
      %v1647 = vrot.slane %v1645, 1
      %v1648 = vsel %vm575, %v1643, %v1647
      %v1650 = vshrl.u32 %v1509, 16
      %v1652 = vshll.u32 %v1509, 16
      %v1654 = vrot.slane %v1652, 1
      %v1655 = vor.u32 %v1650, %v1654
      %v1657 = vshll.u32 %v1589, 16
      %v1659 = vrot.slane %v1657, 1
      %v1660 = vsel %vm575, %v1655, %v1659
      %v1662 = vshrl.u32 %v1510, 16
      %v1664 = vshll.u32 %v1510, 16
      %v1666 = vrot.slane %v1664, 1
      %v1667 = vor.u32 %v1662, %v1666
      %v1669 = vshll.u32 %v1590, 16
      %v1671 = vrot.slane %v1669, 1
      %v1672 = vsel %vm575, %v1667, %v1671
      %v1674 = vshrl.u32 %v1511, 16
      %v1676 = vshll.u32 %v1511, 16
      %v1678 = vrot.slane %v1676, 1
      %v1679 = vor.u32 %v1674, %v1678
      %v1681 = vshll.u32 %v1591, 16
      %v1683 = vrot.slane %v1681, 1
      %v1684 = vsel %vm575, %v1679, %v1683
      %v1686 = vshrl.u32 %v1512, 16
      %v1688 = vshll.u32 %v1512, 16
      %v1690 = vrot.slane %v1688, 1
      %v1691 = vor.u32 %v1686, %v1690
      %v1693 = vshll.u32 %v1592, 16
      %v1695 = vrot.slane %v1693, 1
      %v1696 = vsel %vm575, %v1691, %v1695
      %v1698 = vshrl.u32 %v1513, 16
      %v1700 = vshll.u32 %v1513, 16
      %v1702 = vrot.slane %v1700, 1
      %v1703 = vor.u32 %v1698, %v1702
      %v1705 = vshll.u32 %v1593, 16
      %v1707 = vrot.slane %v1705, 1
      %v1708 = vsel %vm575, %v1703, %v1707
      %v1710 = vshrl.u32 %v1514, 16
      %v1712 = vshll.u32 %v1514, 16
      %v1714 = vrot.slane %v1712, 1
      %v1715 = vor.u32 %v1710, %v1714
      %v1717 = vshll.u32 %v1594, 16
      %v1719 = vrot.slane %v1717, 1
      %v1720 = vsel %vm575, %v1715, %v1719
      %v1722 = vshrl.u32 %v1515, 16
      %v1724 = vshll.u32 %v1515, 16
      %v1726 = vrot.slane %v1724, 1
      %v1727 = vor.u32 %v1722, %v1726
      %v1729 = vshll.u32 %v1595, 16
      %v1731 = vrot.slane %v1729, 1
      %v1732 = vsel %vm575, %v1727, %v1731
      %v1734 = vshrl.u32 %v1516, 16
      %v1736 = vshll.u32 %v1516, 16
      %v1738 = vrot.slane %v1736, 1
      %v1739 = vor.u32 %v1734, %v1738
      %v1741 = vshll.u32 %v1596, 16
      %v1743 = vrot.slane %v1741, 1
      %v1744 = vsel %vm575, %v1739, %v1743
      %v1746 = vshrl.u32 %v1517, 16
      %v1748 = vshll.u32 %v1517, 16
      %v1750 = vrot.slane %v1748, 1
      %v1751 = vor.u32 %v1746, %v1750
      %v1753 = vshll.u32 %v1597, 16
      %v1755 = vrot.slane %v1753, 1
      %v1756 = vsel %vm575, %v1751, %v1755
      %v1758 = vshrl.u32 %v1518, 16
      %v1760 = vshll.u32 %v1518, 16
      %v1762 = vrot.slane %v1760, 1
      %v1763 = vor.u32 %v1758, %v1762
      %v1765 = vshll.u32 %v1598, 16
      %v1767 = vrot.slane %v1765, 1
      %v1768 = vsel %vm575, %v1763, %v1767
      %v1770 = vshrl.u32 %v1519, 16
      %v1772 = vshll.u32 %v1519, 16
      %v1774 = vrot.slane %v1772, 1
      %v1775 = vor.u32 %v1770, %v1774
      %v1777 = vshll.u32 %v1599, 16
      %v1779 = vrot.slane %v1777, 1
      %v1780 = vsel %vm575, %v1775, %v1779
      %v1782 = vshrl.u32 %v1520, 16
      %v1784 = vshll.u32 %v1520, 16
      %v1786 = vrot.slane %v1784, 1
      %v1787 = vor.u32 %v1782, %v1786
      %v1789 = vshll.u32 %v1600, 16
      %v1791 = vrot.slane %v1789, 1
      %v1792 = vsel %vm575, %v1787, %v1791
      %1793 = vrot.lane.b32.xlu0 %v1612, 28
      %v1794 = vpop.permute.xlu0 %1793
      %1795 = vrot.lane.b32.xlu0 %v1624, 28
      %v1796 = vpop.permute.xlu0 %1795
      %1797 = vrot.lane.b32.xlu0 %v1636, 28
      %v1798 = vpop.permute.xlu0 %1797
      %1799 = vrot.lane.b32.xlu0 %v1648, 28
      %v1800 = vpop.permute.xlu0 %1799
      %1801 = vrot.lane.b32.xlu0 %v1660, 28
      %v1802 = vpop.permute.xlu0 %1801
      %1803 = vrot.lane.b32.xlu0 %v1672, 28
      %v1804 = vpop.permute.xlu0 %1803
      %1805 = vrot.lane.b32.xlu0 %v1684, 28
      %v1806 = vpop.permute.xlu0 %1805
      %1807 = vrot.lane.b32.xlu0 %v1696, 28
      %v1808 = vpop.permute.xlu0 %1807
      %1809 = vrot.lane.b32.xlu0 %v1708, 28
      %v1810 = vpop.permute.xlu0 %1809
      %1811 = vrot.lane.b32.xlu0 %v1720, 28
      %v1812 = vpop.permute.xlu0 %1811
      %1813 = vrot.lane.b32.xlu0 %v1732, 28
      %v1814 = vpop.permute.xlu0 %1813
      %1815 = vrot.lane.b32.xlu0 %v1744, 28
      %v1816 = vpop.permute.xlu0 %1815
      %1817 = vrot.lane.b32.xlu0 %v1756, 28
      %v1818 = vpop.permute.xlu0 %1817
      %1819 = vrot.lane.b32.xlu0 %v1768, 28
      %v1820 = vpop.permute.xlu0 %1819
      %1821 = vrot.lane.b32.xlu0 %v1780, 28
      %v1822 = vpop.permute.xlu0 %1821
      %1823 = vrot.lane.b32.xlu0 %v1792, 28
      %v1824 = vpop.permute.xlu0 %1823
      %v1841 = vunpack.c.l.b16 %v431
      %v1842 = vunpack.c.l.b16 %v432
      %v1843 = vunpack.c.l.b16 %v433
      %v1844 = vunpack.c.l.b16 %v434
      %v1845 = vunpack.c.l.b16 %v435
      %v1846 = vunpack.c.l.b16 %v436
      %v1847 = vunpack.c.l.b16 %v437
      %v1848 = vunpack.c.l.b16 %v438
      %v1849 = vunpack.c.l.b16 %v439
      %v1850 = vunpack.c.l.b16 %v440
      %v1851 = vunpack.c.l.b16 %v441
      %v1852 = vunpack.c.l.b16 %v442
      %v1853 = vunpack.c.l.b16 %v443
      %v1854 = vunpack.c.l.b16 %v444
      %v1855 = vunpack.c.l.b16 %v445
      %v1856 = vunpack.c.l.b16 %v446
      %v1857 = vpack.c.b16 %v1474, %v1841
      %v1858 = vpack.c.b16 %v1476, %v1842
      %v1859 = vpack.c.b16 %v1478, %v1843
      %v1860 = vpack.c.b16 %v1480, %v1844
      %v1861 = vpack.c.b16 %v1482, %v1845
      %v1862 = vpack.c.b16 %v1484, %v1846
      %v1863 = vpack.c.b16 %v1486, %v1847
      %v1864 = vpack.c.b16 %v1488, %v1848
      %v1865 = vpack.c.b16 %v1490, %v1849
      %v1866 = vpack.c.b16 %v1492, %v1850
      %v1867 = vpack.c.b16 %v1494, %v1851
      %v1868 = vpack.c.b16 %v1496, %v1852
      %v1869 = vpack.c.b16 %v1498, %v1853
      %v1870 = vpack.c.b16 %v1500, %v1854
      %v1871 = vpack.c.b16 %v1502, %v1855
      %v1872 = vpack.c.b16 %v1504, %v1856
      %v1873 = vrot.slane %v1857, 1
      %v1874 = vrot.slane %v1585, 1
      %v1875 = vsel %vm848, %v1873, %v1874
      %v1876 = vrot.slane %v1858, 1
      %v1877 = vrot.slane %v1586, 1
      %v1878 = vsel %vm848, %v1876, %v1877
      %v1879 = vrot.slane %v1859, 1
      %v1880 = vrot.slane %v1587, 1
      %v1881 = vsel %vm848, %v1879, %v1880
      %v1882 = vrot.slane %v1860, 1
      %v1883 = vrot.slane %v1588, 1
      %v1884 = vsel %vm848, %v1882, %v1883
      %v1885 = vrot.slane %v1861, 1
      %v1886 = vrot.slane %v1589, 1
      %v1887 = vsel %vm848, %v1885, %v1886
      %v1888 = vrot.slane %v1862, 1
      %v1889 = vrot.slane %v1590, 1
      %v1890 = vsel %vm848, %v1888, %v1889
      %v1891 = vrot.slane %v1863, 1
      %v1892 = vrot.slane %v1591, 1
      %v1893 = vsel %vm848, %v1891, %v1892
      %v1894 = vrot.slane %v1864, 1
      %v1895 = vrot.slane %v1592, 1
      %v1896 = vsel %vm848, %v1894, %v1895
      %v1897 = vrot.slane %v1865, 1
      %v1898 = vrot.slane %v1593, 1
      %v1899 = vsel %vm848, %v1897, %v1898
      %v1900 = vrot.slane %v1866, 1
      %v1901 = vrot.slane %v1594, 1
      %v1902 = vsel %vm848, %v1900, %v1901
      %v1903 = vrot.slane %v1867, 1
      %v1904 = vrot.slane %v1595, 1
      %v1905 = vsel %vm848, %v1903, %v1904
      %v1906 = vrot.slane %v1868, 1
      %v1907 = vrot.slane %v1596, 1
      %v1908 = vsel %vm848, %v1906, %v1907
      %v1909 = vrot.slane %v1869, 1
      %v1910 = vrot.slane %v1597, 1
      %v1911 = vsel %vm848, %v1909, %v1910
      %v1912 = vrot.slane %v1870, 1
      %v1913 = vrot.slane %v1598, 1
      %v1914 = vsel %vm848, %v1912, %v1913
      %v1915 = vrot.slane %v1871, 1
      %v1916 = vrot.slane %v1599, 1
      %v1917 = vsel %vm848, %v1915, %v1916
      %v1918 = vrot.slane %v1872, 1
      %v1919 = vrot.slane %v1600, 1
      %v1920 = vsel %vm848, %v1918, %v1919
      %1921 = vrot.lane.b32.xlu0 %v1875, 32
      %v1922 = vpop.permute.xlu0 %1921
      %1923 = vrot.lane.b32.xlu0 %v1878, 32
      %v1924 = vpop.permute.xlu0 %1923
      %1925 = vrot.lane.b32.xlu0 %v1881, 32
      %v1926 = vpop.permute.xlu0 %1925
      %1927 = vrot.lane.b32.xlu0 %v1884, 32
      %v1928 = vpop.permute.xlu0 %1927
      %1929 = vrot.lane.b32.xlu0 %v1887, 32
      %v1930 = vpop.permute.xlu0 %1929
      %1931 = vrot.lane.b32.xlu0 %v1890, 32
      %v1932 = vpop.permute.xlu0 %1931
      %1933 = vrot.lane.b32.xlu0 %v1893, 32
      %v1934 = vpop.permute.xlu0 %1933
      %1935 = vrot.lane.b32.xlu0 %v1896, 32
      %v1936 = vpop.permute.xlu0 %1935
      %1937 = vrot.lane.b32.xlu0 %v1899, 32
      %v1938 = vpop.permute.xlu0 %1937
      %1939 = vrot.lane.b32.xlu0 %v1902, 32
      %v1940 = vpop.permute.xlu0 %1939
      %1941 = vrot.lane.b32.xlu0 %v1905, 32
      %v1942 = vpop.permute.xlu0 %1941
      %1943 = vrot.lane.b32.xlu0 %v1908, 32
      %v1944 = vpop.permute.xlu0 %1943
      %1945 = vrot.lane.b32.xlu0 %v1911, 32
      %v1946 = vpop.permute.xlu0 %1945
      %1947 = vrot.lane.b32.xlu0 %v1914, 32
      %v1948 = vpop.permute.xlu0 %1947
      %1949 = vrot.lane.b32.xlu0 %v1917, 32
      %v1950 = vpop.permute.xlu0 %1949
      %1951 = vrot.lane.b32.xlu0 %v1920, 32
      %v1952 = vpop.permute.xlu0 %1951
      %vm1953 = vcmask 31744
      %v1955 = vsel %vm1953, %v511, %v769
      %v1957 = vsel %vm1953, %v512, %v771
      %v1959 = vsel %vm1953, %v513, %v773
      %v1961 = vsel %vm1953, %v514, %v775
      %v1963 = vsel %vm1953, %v515, %v777
      %v1965 = vsel %vm1953, %v516, %v779
      %v1967 = vsel %vm1953, %v517, %v781
      %v1969 = vsel %vm1953, %v518, %v783
      %v1971 = vsel %vm1953, %v519, %v785
      %v1973 = vsel %vm1953, %v520, %v787
      %v1975 = vsel %vm1953, %v521, %v789
      %v1977 = vsel %vm1953, %v522, %v791
      %v1979 = vsel %vm1953, %v523, %v793
      %v1981 = vsel %vm1953, %v524, %v795
      %v1983 = vsel %vm1953, %v525, %v797
      %v1985 = vsel %vm1953, %v526, %v799
      %vm1986 = vcmask 64512
      %v1988 = vsel %vm1986, %v1955, %v898
      %v1990 = vsel %vm1986, %v1957, %v900
      %v1992 = vsel %vm1986, %v1959, %v902
      %v1994 = vsel %vm1986, %v1961, %v904
      %v1996 = vsel %vm1986, %v1963, %v906
      %v1998 = vsel %vm1986, %v1965, %v908
      %v2000 = vsel %vm1986, %v1967, %v910
      %v2002 = vsel %vm1986, %v1969, %v912
      %v2004 = vsel %vm1986, %v1971, %v914
      %v2006 = vsel %vm1986, %v1973, %v916
      %v2008 = vsel %vm1986, %v1975, %v918
      %v2010 = vsel %vm1986, %v1977, %v920
      %v2012 = vsel %vm1986, %v1979, %v922
      %v2014 = vsel %vm1986, %v1981, %v924
      %v2016 = vsel %vm1986, %v1983, %v926
      %v2018 = vsel %vm1986, %v1985, %v928
      %vm2019 = vcmask 97280
      %v2021 = vsel %vm2019, %v1988, %v1010
      %v2023 = vsel %vm2019, %v1990, %v1012
      %v2025 = vsel %vm2019, %v1992, %v1014
      %v2027 = vsel %vm2019, %v1994, %v1016
      %v2029 = vsel %vm2019, %v1996, %v1018
      %v2031 = vsel %vm2019, %v1998, %v1020
      %v2033 = vsel %vm2019, %v2000, %v1022
      %v2035 = vsel %vm2019, %v2002, %v1024
      %v2037 = vsel %vm2019, %v2004, %v1026
      %v2039 = vsel %vm2019, %v2006, %v1028
      %v2041 = vsel %vm2019, %v2008, %v1030
      %v2043 = vsel %vm2019, %v2010, %v1032
      %v2045 = vsel %vm2019, %v2012, %v1034
      %v2047 = vsel %vm2019, %v2014, %v1036
      %v2049 = vsel %vm2019, %v2016, %v1038
      %v2051 = vsel %vm2019, %v2018, %v1040
      %vm2052 = vcmask 130048
      %v2054 = vsel %vm2052, %v2021, %v1282
      %v2056 = vsel %vm2052, %v2023, %v1284
      %v2058 = vsel %vm2052, %v2025, %v1286
      %v2060 = vsel %vm2052, %v2027, %v1288
      %v2062 = vsel %vm2052, %v2029, %v1290
      %v2064 = vsel %vm2052, %v2031, %v1292
      %v2066 = vsel %vm2052, %v2033, %v1294
      %v2068 = vsel %vm2052, %v2035, %v1296
      %v2070 = vsel %vm2052, %v2037, %v1298
      %v2072 = vsel %vm2052, %v2039, %v1300
      %v2074 = vsel %vm2052, %v2041, %v1302
      %v2076 = vsel %vm2052, %v2043, %v1304
      %v2078 = vsel %vm2052, %v2045, %v1306
      %v2080 = vsel %vm2052, %v2047, %v1308
      %v2082 = vsel %vm2052, %v2049, %v1310
      %v2084 = vsel %vm2052, %v2051, %v1312
      %vm2085 = vcmask 162816
      %v2087 = vsel %vm2085, %v2054, %v1410
      %v2089 = vsel %vm2085, %v2056, %v1412
      %v2091 = vsel %vm2085, %v2058, %v1414
      %v2093 = vsel %vm2085, %v2060, %v1416
      %v2095 = vsel %vm2085, %v2062, %v1418
      %v2097 = vsel %vm2085, %v2064, %v1420
      %v2099 = vsel %vm2085, %v2066, %v1422
      %v2101 = vsel %vm2085, %v2068, %v1424
      %v2103 = vsel %vm2085, %v2070, %v1426
      %v2105 = vsel %vm2085, %v2072, %v1428
      %v2107 = vsel %vm2085, %v2074, %v1430
      %v2109 = vsel %vm2085, %v2076, %v1432
      %v2111 = vsel %vm2085, %v2078, %v1434
      %v2113 = vsel %vm2085, %v2080, %v1436
      %v2115 = vsel %vm2085, %v2082, %v1438
      %v2117 = vsel %vm2085, %v2084, %v1440
      %vm2118 = vcmask 195584
      %v2120 = vsel %vm2118, %v2087, %v1522
      %v2122 = vsel %vm2118, %v2089, %v1524
      %v2124 = vsel %vm2118, %v2091, %v1526
      %v2126 = vsel %vm2118, %v2093, %v1528
      %v2128 = vsel %vm2118, %v2095, %v1530
      %v2130 = vsel %vm2118, %v2097, %v1532
      %v2132 = vsel %vm2118, %v2099, %v1534
      %v2134 = vsel %vm2118, %v2101, %v1536
      %v2136 = vsel %vm2118, %v2103, %v1538
      %v2138 = vsel %vm2118, %v2105, %v1540
      %v2140 = vsel %vm2118, %v2107, %v1542
      %v2142 = vsel %vm2118, %v2109, %v1544
      %v2144 = vsel %vm2118, %v2111, %v1546
      %v2146 = vsel %vm2118, %v2113, %v1548
      %v2148 = vsel %vm2118, %v2115, %v1550
      %v2150 = vsel %vm2118, %v2117, %v1552
      %vm2151 = vcmask 228352
      %v2153 = vsel %vm2151, %v2120, %v1794
      %v2155 = vsel %vm2151, %v2122, %v1796
      %v2157 = vsel %vm2151, %v2124, %v1798
      %v2159 = vsel %vm2151, %v2126, %v1800
      %v2161 = vsel %vm2151, %v2128, %v1802
      %v2163 = vsel %vm2151, %v2130, %v1804
      %v2165 = vsel %vm2151, %v2132, %v1806
      %v2167 = vsel %vm2151, %v2134, %v1808
      %v2169 = vsel %vm2151, %v2136, %v1810
      %v2171 = vsel %vm2151, %v2138, %v1812
      %v2173 = vsel %vm2151, %v2140, %v1814
      %v2175 = vsel %vm2151, %v2142, %v1816
      %v2177 = vsel %vm2151, %v2144, %v1818
      %v2179 = vsel %vm2151, %v2146, %v1820
      %v2181 = vsel %vm2151, %v2148, %v1822
      %v2183 = vsel %vm2151, %v2150, %v1824
      %vm2184 = vcmask 261120
      %v2186 = vsel %vm2184, %v2153, %v1922
      %v2188 = vsel %vm2184, %v2155, %v1924
      %v2190 = vsel %vm2184, %v2157, %v1926
      %v2192 = vsel %vm2184, %v2159, %v1928
      %v2194 = vsel %vm2184, %v2161, %v1930
      %v2196 = vsel %vm2184, %v2163, %v1932
      %v2198 = vsel %vm2184, %v2165, %v1934
      %v2200 = vsel %vm2184, %v2167, %v1936
      %v2202 = vsel %vm2184, %v2169, %v1938
      %v2204 = vsel %vm2184, %v2171, %v1940
      %v2206 = vsel %vm2184, %v2173, %v1942
      %v2208 = vsel %vm2184, %v2175, %v1944
      %v2210 = vsel %vm2184, %v2177, %v1946
      %v2212 = vsel %vm2184, %v2179, %v1948
      %v2214 = vsel %vm2184, %v2181, %v1950
      %v2216 = vsel %vm2184, %v2183, %v1952
      %v2217 = vld [vmem:[%s224] sm:$0xf]
      %v2218 = vld [vmem:[%s224 + $0x4] sm:$0xf]
      %v2219 = vld [vmem:[%s224 + $0x8] sm:$0xf]
      %v2220 = vld [vmem:[%s224 + $0xc] sm:$0xf]
      %v2221 = vld [vmem:[%s224 + $0x10] sm:$0x3]
      %v2222 = vld [vmem:[%s227] sm:$0x1]
      %v2224 = vlaneseq
      %v2225 = vshrl.u32 %v2224, 7
      %v2226 = vsub.s32 0, %v2225
      %v2227 = vrot.slane %v2222, %v2226
      %v2234 = vunpack.c.l.b16 %v2217
      %v2235 = vunpack.c.l.b16 %v2218
      %v2236 = vunpack.c.l.b16 %v2219
      %v2237 = vunpack.c.l.b16 %v2220
      %v2238 = vunpack.c.l.b16 %v2221
      %v2239 = vpack.c.b16 %v2235, %v2234
      %v2240 = vpack.c.b16 %v2237, %v2236
      %v2241 = vpack.c.b16 %v2238, %v2238
      %vm2244 = vcmask 293888
      %v2245 = vsel %vm2244, %v2186, 0
      %v2247 = vsel %vm2244, %v2188, 0
      %v2249 = vsel %vm2244, %v2190, 0
      %v2251 = vsel %vm2244, %v2192, 0
      %v2253 = vsel %vm2244, %v2194, 0
      %v2255 = vsel %vm2244, %v2196, 0
      %v2257 = vsel %vm2244, %v2198, 0
      %v2259 = vsel %vm2244, %v2200, 0
      %v2261 = vsel %vm2244, %v2202, 0
      %v2263 = vsel %vm2244, %v2204, 0
      %v2265 = vsel %vm2244, %v2206, 0
      %v2267 = vsel %vm2244, %v2208, 0
      %v2269 = vsel %vm2244, %v2210, 0
      %v2271 = vsel %vm2244, %v2212, 0
      %v2273 = vsel %vm2244, %v2214, 0
      %v2275 = vsel %vm2244, %v2216, 0
      %vm2277 = vcmask 1041408
      %v2279 = vsel %vm2277, %v2241, 0
      %2281 = vmatprep.subr.bf16.mxu0 0
      %2282 = vmatpush1.bf16.msra.mxu0 0
      %2283 = vmatprep.subr.bf16.mxu0 0
      %2284 = vmatpush1.bf16.msra.mxu0 0
      %2285 = vmatprep.subr.bf16.mxu0 0
      %2286 = vmatpush1.bf16.msra.mxu0 0
      %2287 = vmatprep.subr.bf16.mxu0 0
      %2288 = vmatpush1.bf16.msra.mxu0 0
      %2289 = vmatprep.subr.bf16.mxu0 0
      %2290 = vmatpush1.bf16.msra.mxu0 0
      %2291 = vmatprep.subr.bf16.mxu0 0
      %2292 = vmatpush1.bf16.msra.mxu0 %v2279
      %2293 = vmatprep.subr.bf16.mxu0 0
      %2294 = vmatpush1.bf16.msra.mxu0 %v2240
      %2295 = vmatprep.subr.bf16.mxu0 0
      %2296 = vmatpush1.bf16.msra.mxu0 %v2239
      %2297 = vmatprep.subr.bf16.mxu0 0
      %2298 = vmatpush2.bf16.msra.mxu0 0
      %2299 = vmatprep.subr.bf16.mxu0 0
      %2300 = vmatpush2.bf16.msra.mxu0 0
      %2301 = vmatprep.subr.bf16.mxu0 0
      %2302 = vmatpush2.bf16.msra.mxu0 0
      %2303 = vmatprep.subr.bf16.mxu0 0
      %2304 = vmatpush2.bf16.msra.mxu0 0
      %2305 = vmatprep.subr.bf16.mxu0 0
      %2306 = vmatpush2.bf16.msra.mxu0 0
      %2307 = vmatprep.subr.bf16.mxu0 0
      %2308 = vmatpush2.bf16.msra.mxu0 0
      %2309 = vmatprep.subr.bf16.mxu0 0
      %2310 = vmatpush2.bf16.msra.mxu0 0
      %2311 = vmatprep.subr.bf16.mxu0 0
      %2312 = vmatpush2.bf16.msra.mxu0 0
      %2313 = vmatprep.mubr.bf16.mxu0 0
      %2314 = vmatmul.mubr.bf16.gmra.mxu0 %v2245
      %v2315 = vpop.f32.mrf.mxu0
      %v2316 = vadd.f32 %v2227, %v2315
      %v2317 = vpop.f32.mrf.mxu0
      %v2318 = vpop.f32.mrf.mxu0
      %v2319 = vadd.f32 %v2227, %v2318
      %v2320 = vpop.f32.mrf.mxu0
      %2321 = vmatprep.mubr.bf16.mxu0 0
      %2322 = vmatmul.mubr.bf16.gmra.mxu0 %v2247
      %v2323 = vpop.f32.mrf.mxu0
      %v2324 = vadd.f32 %v2227, %v2323
      %v2325 = vpop.f32.mrf.mxu0
      %v2326 = vpop.f32.mrf.mxu0
      %v2327 = vadd.f32 %v2227, %v2326
      %v2328 = vpop.f32.mrf.mxu0
      %2329 = vmatprep.mubr.bf16.mxu0 0
      %2330 = vmatmul.mubr.bf16.gmra.mxu0 %v2249
      %v2331 = vpop.f32.mrf.mxu0
      %v2332 = vadd.f32 %v2227, %v2331
      %v2333 = vpop.f32.mrf.mxu0
      %v2334 = vpop.f32.mrf.mxu0
      %v2335 = vadd.f32 %v2227, %v2334
      %v2336 = vpop.f32.mrf.mxu0
      %2337 = vmatprep.mubr.bf16.mxu0 0
      %2338 = vmatmul.mubr.bf16.gmra.mxu0 %v2251
      %v2339 = vpop.f32.mrf.mxu0
      %v2340 = vadd.f32 %v2227, %v2339
      %v2341 = vpop.f32.mrf.mxu0
      %v2342 = vpop.f32.mrf.mxu0
      %v2343 = vadd.f32 %v2227, %v2342
      %v2344 = vpop.f32.mrf.mxu0
      %2345 = vmatprep.mubr.bf16.mxu0 0
      %2346 = vmatmul.mubr.bf16.gmra.mxu0 %v2253
      %v2347 = vpop.f32.mrf.mxu0
      %v2348 = vadd.f32 %v2227, %v2347
      %v2349 = vpop.f32.mrf.mxu0
      %v2350 = vpop.f32.mrf.mxu0
      %v2351 = vadd.f32 %v2227, %v2350
      %v2352 = vpop.f32.mrf.mxu0
      %2353 = vmatprep.mubr.bf16.mxu0 0
      %2354 = vmatmul.mubr.bf16.gmra.mxu0 %v2255
      %v2355 = vpop.f32.mrf.mxu0
      %v2356 = vadd.f32 %v2227, %v2355
      %v2357 = vpop.f32.mrf.mxu0
      %v2358 = vpop.f32.mrf.mxu0
      %v2359 = vadd.f32 %v2227, %v2358
      %v2360 = vpop.f32.mrf.mxu0
      %2361 = vmatprep.mubr.bf16.mxu0 0
      %2362 = vmatmul.mubr.bf16.gmra.mxu0 %v2257
      %v2363 = vpop.f32.mrf.mxu0
      %v2364 = vadd.f32 %v2227, %v2363
      %v2365 = vpop.f32.mrf.mxu0
      %v2366 = vpop.f32.mrf.mxu0
      %v2367 = vadd.f32 %v2227, %v2366
      %v2368 = vpop.f32.mrf.mxu0
      %2369 = vmatprep.mubr.bf16.mxu0 0
      %2370 = vmatmul.mubr.bf16.gmra.mxu0 %v2259
      %v2371 = vpop.f32.mrf.mxu0
      %v2372 = vadd.f32 %v2227, %v2371
      %v2373 = vpop.f32.mrf.mxu0
      %v2374 = vpop.f32.mrf.mxu0
      %v2375 = vadd.f32 %v2227, %v2374
      %v2376 = vpop.f32.mrf.mxu0
      %2377 = vmatprep.mubr.bf16.mxu0 0
      %2378 = vmatmul.mubr.bf16.gmra.mxu0 %v2261
      %v2379 = vpop.f32.mrf.mxu0
      %v2380 = vadd.f32 %v2227, %v2379
      %v2381 = vpop.f32.mrf.mxu0
      %v2382 = vpop.f32.mrf.mxu0
      %v2383 = vadd.f32 %v2227, %v2382
      %v2384 = vpop.f32.mrf.mxu0
      %2385 = vmatprep.mubr.bf16.mxu0 0
      %2386 = vmatmul.mubr.bf16.gmra.mxu0 %v2263
      %v2387 = vpop.f32.mrf.mxu0
      %v2388 = vadd.f32 %v2227, %v2387
      %v2389 = vpop.f32.mrf.mxu0
      %v2390 = vpop.f32.mrf.mxu0
      %v2391 = vadd.f32 %v2227, %v2390
      %v2392 = vpop.f32.mrf.mxu0
      %2393 = vmatprep.mubr.bf16.mxu0 0
      %2394 = vmatmul.mubr.bf16.gmra.mxu0 %v2265
      %v2395 = vpop.f32.mrf.mxu0
      %v2396 = vadd.f32 %v2227, %v2395
      %v2397 = vpop.f32.mrf.mxu0
      %v2398 = vpop.f32.mrf.mxu0
      %v2399 = vadd.f32 %v2227, %v2398
      %v2400 = vpop.f32.mrf.mxu0
      %2401 = vmatprep.mubr.bf16.mxu0 0
      %2402 = vmatmul.mubr.bf16.gmra.mxu0 %v2267
      %v2403 = vpop.f32.mrf.mxu0
      %v2404 = vadd.f32 %v2227, %v2403
      %v2405 = vpop.f32.mrf.mxu0
      %v2406 = vpop.f32.mrf.mxu0
      %v2407 = vadd.f32 %v2227, %v2406
      %v2408 = vpop.f32.mrf.mxu0
      %2409 = vmatprep.mubr.bf16.mxu0 0
      %2410 = vmatmul.mubr.bf16.gmra.mxu0 %v2269
      %v2411 = vpop.f32.mrf.mxu0
      %v2412 = vadd.f32 %v2227, %v2411
      %v2413 = vpop.f32.mrf.mxu0
      %v2414 = vpop.f32.mrf.mxu0
      %v2415 = vadd.f32 %v2227, %v2414
      %v2416 = vpop.f32.mrf.mxu0
      %2417 = vmatprep.mubr.bf16.mxu0 0
      %2418 = vmatmul.mubr.bf16.gmra.mxu0 %v2271
      %v2419 = vpop.f32.mrf.mxu0
      %v2420 = vadd.f32 %v2227, %v2419
      %v2421 = vpop.f32.mrf.mxu0
      %v2422 = vpop.f32.mrf.mxu0
      %v2423 = vadd.f32 %v2227, %v2422
      %v2424 = vpop.f32.mrf.mxu0
      %2425 = vmatprep.mubr.bf16.mxu0 0
      %2426 = vmatmul.mubr.bf16.gmra.mxu0 %v2273
      %v2427 = vpop.f32.mrf.mxu0
      %v2428 = vadd.f32 %v2227, %v2427
      %v2429 = vpop.f32.mrf.mxu0
      %v2430 = vpop.f32.mrf.mxu0
      %v2431 = vadd.f32 %v2227, %v2430
      %v2432 = vpop.f32.mrf.mxu0
      %2433 = vmatprep.mubr.bf16.mxu0 0
      %2434 = vmatmul.mubr.bf16.gmra.mxu0 %v2275
      %v2435 = vpop.f32.mrf.mxu0
      %v2436 = vadd.f32 %v2227, %v2435
      %v2437 = vpop.f32.mrf.mxu0
      %v2438 = vpop.f32.mrf.mxu0
      %v2439 = vadd.f32 %v2227, %v2438
      %v2440 = vpop.f32.mrf.mxu0
      %2441 = vdwg.mxu0
      %v2442 = vmax.f32 %v2316, 0.0
      %v2443 = vmax.f32 %v2319, 0.0
      %v2444 = vmax.f32 %v2324, 0.0
      %v2445 = vmax.f32 %v2327, 0.0
      %v2446 = vmax.f32 %v2332, 0.0
      %v2447 = vmax.f32 %v2335, 0.0
      %v2448 = vmax.f32 %v2340, 0.0
      %v2449 = vmax.f32 %v2343, 0.0
      %v2450 = vmax.f32 %v2348, 0.0
      %v2451 = vmax.f32 %v2351, 0.0
      %v2452 = vmax.f32 %v2356, 0.0
      %v2453 = vmax.f32 %v2359, 0.0
      %v2454 = vmax.f32 %v2364, 0.0
      %v2455 = vmax.f32 %v2367, 0.0
      %v2456 = vmax.f32 %v2372, 0.0
      %v2457 = vmax.f32 %v2375, 0.0
      %v2458 = vmax.f32 %v2380, 0.0
      %v2459 = vmax.f32 %v2383, 0.0
      %v2460 = vmax.f32 %v2388, 0.0
      %v2461 = vmax.f32 %v2391, 0.0
      %v2462 = vmax.f32 %v2396, 0.0
      %v2463 = vmax.f32 %v2399, 0.0
      %v2464 = vmax.f32 %v2404, 0.0
      %v2465 = vmax.f32 %v2407, 0.0
      %v2466 = vmax.f32 %v2412, 0.0
      %v2467 = vmax.f32 %v2415, 0.0
      %v2468 = vmax.f32 %v2420, 0.0
      %v2469 = vmax.f32 %v2423, 0.0
      %v2470 = vmax.f32 %v2428, 0.0
      %v2471 = vmax.f32 %v2431, 0.0
      %v2472 = vmax.f32 %v2436, 0.0
      %v2473 = vmax.f32 %v2439, 0.0
      %v2474 = vpack.c.bf16 %v2443, %v2442
      %v2475 = vpack.c.bf16 %v2445, %v2444
      %v2476 = vpack.c.bf16 %v2447, %v2446
      %v2477 = vpack.c.bf16 %v2449, %v2448
      %v2478 = vpack.c.bf16 %v2451, %v2450
      %v2479 = vpack.c.bf16 %v2453, %v2452
      %v2480 = vpack.c.bf16 %v2455, %v2454
      %v2481 = vpack.c.bf16 %v2457, %v2456
      %v2482 = vpack.c.bf16 %v2459, %v2458
      %v2483 = vpack.c.bf16 %v2461, %v2460
      %v2484 = vpack.c.bf16 %v2463, %v2462
      %v2485 = vpack.c.bf16 %v2465, %v2464
      %v2486 = vpack.c.bf16 %v2467, %v2466
      %v2487 = vpack.c.bf16 %v2469, %v2468
      %v2488 = vpack.c.bf16 %v2471, %v2470
      %v2489 = vpack.c.bf16 %v2473, %v2472
      %v2506 = vunpack.c.l.b16 %v2474
      %v2507 = vunpack.c.h.b16 %v2474
      %v2508 = vunpack.c.l.b16 %v2475
      %v2509 = vunpack.c.h.b16 %v2475
      %v2510 = vunpack.c.l.b16 %v2476
      %v2511 = vunpack.c.h.b16 %v2476
      %v2512 = vunpack.c.l.b16 %v2477
      %v2513 = vunpack.c.h.b16 %v2477
      %v2514 = vunpack.c.l.b16 %v2478
      %v2515 = vunpack.c.h.b16 %v2478
      %v2516 = vunpack.c.l.b16 %v2479
      %v2517 = vunpack.c.h.b16 %v2479
      %v2518 = vunpack.c.l.b16 %v2480
      %v2519 = vunpack.c.h.b16 %v2480
      %v2520 = vunpack.c.l.b16 %v2481
      %v2521 = vunpack.c.h.b16 %v2481
      %v2522 = vunpack.c.l.b16 %v2482
      %v2523 = vunpack.c.h.b16 %v2482
      %v2524 = vunpack.c.l.b16 %v2483
      %v2525 = vunpack.c.h.b16 %v2483
      %v2526 = vunpack.c.l.b16 %v2484
      %v2527 = vunpack.c.h.b16 %v2484
      %v2528 = vunpack.c.l.b16 %v2485
      %v2529 = vunpack.c.h.b16 %v2485
      %v2530 = vunpack.c.l.b16 %v2486
      %v2531 = vunpack.c.h.b16 %v2486
      %v2532 = vunpack.c.l.b16 %v2487
      %v2533 = vunpack.c.h.b16 %v2487
      %v2534 = vunpack.c.l.b16 %v2488
      %v2535 = vunpack.c.h.b16 %v2488
      %v2536 = vunpack.c.l.b16 %v2489
      %v2537 = vunpack.c.h.b16 %v2489
      %v2538 = vpack.c.b16 %v2506, %v2506
      %v2539 = vpack.c.b16 %v2507, %v2507
      %v2540 = vpack.c.b16 %v2508, %v2508
      %v2541 = vpack.c.b16 %v2509, %v2509
      %v2542 = vpack.c.b16 %v2510, %v2510
      %v2543 = vpack.c.b16 %v2511, %v2511
      %v2544 = vpack.c.b16 %v2512, %v2512
      %v2545 = vpack.c.b16 %v2513, %v2513
      %v2546 = vpack.c.b16 %v2514, %v2514
      %v2547 = vpack.c.b16 %v2515, %v2515
      %v2548 = vpack.c.b16 %v2516, %v2516
      %v2549 = vpack.c.b16 %v2517, %v2517
      %v2550 = vpack.c.b16 %v2518, %v2518
      %v2551 = vpack.c.b16 %v2519, %v2519
      %v2552 = vpack.c.b16 %v2520, %v2520
      %v2553 = vpack.c.b16 %v2521, %v2521
      %v2554 = vpack.c.b16 %v2522, %v2522
      %v2555 = vpack.c.b16 %v2523, %v2523
      %v2556 = vpack.c.b16 %v2524, %v2524
      %v2557 = vpack.c.b16 %v2525, %v2525
      %v2558 = vpack.c.b16 %v2526, %v2526
      %v2559 = vpack.c.b16 %v2527, %v2527
      %v2560 = vpack.c.b16 %v2528, %v2528
      %v2561 = vpack.c.b16 %v2529, %v2529
      %v2562 = vpack.c.b16 %v2530, %v2530
      %v2563 = vpack.c.b16 %v2531, %v2531
      %v2564 = vpack.c.b16 %v2532, %v2532
      %v2565 = vpack.c.b16 %v2533, %v2533
      %v2566 = vpack.c.b16 %v2534, %v2534
      %v2567 = vpack.c.b16 %v2535, %v2535
      %v2568 = vpack.c.b16 %v2536, %v2536
      %v2569 = vpack.c.b16 %v2537, %v2537
      %2602 = vst [vmem:[%s240] sm:$0xf] %v2538
      %2603 = vst [vmem:[%s240 + $0x4] sm:$0xf] %v2539
      %2604 = vst [vmem:[%s240 + $0x8] sm:$0xf] %v2540
      %2605 = vst [vmem:[%s240 + $0xc] sm:$0xf] %v2541
      %2606 = vst [vmem:[%s240 + $0x10] sm:$0xf] %v2542
      %2607 = vst [vmem:[%s240 + $0x14] sm:$0xf] %v2543
      %2608 = vst [vmem:[%s240 + $0x18] sm:$0xf] %v2544
      %2609 = vst [vmem:[%s240 + $0x1c] sm:$0xf] %v2545
      %2610 = vst [vmem:[%s240 + $0x20] sm:$0xf] %v2546
      %2611 = vst [vmem:[%s240 + $0x24] sm:$0xf] %v2547
      %2612 = vst [vmem:[%s240 + $0x28] sm:$0xf] %v2548
      %2613 = vst [vmem:[%s240 + $0x2c] sm:$0xf] %v2549
      %2614 = vst [vmem:[%s240 + $0x30] sm:$0xf] %v2550
      %2615 = vst [vmem:[%s240 + $0x34] sm:$0xf] %v2551
      %2616 = vst [vmem:[%s240 + $0x38] sm:$0xf] %v2552
      %2617 = vst [vmem:[%s240 + $0x3c] sm:$0xf] %v2553
      %2618 = vst [vmem:[%s240 + $0x40] sm:$0xf] %v2554
      %2619 = vst [vmem:[%s240 + $0x44] sm:$0xf] %v2555
      %2620 = vst [vmem:[%s240 + $0x48] sm:$0xf] %v2556
      %2621 = vst [vmem:[%s240 + $0x4c] sm:$0xf] %v2557
      %2622 = vst [vmem:[%s240 + $0x50] sm:$0xf] %v2558
      %2623 = vst [vmem:[%s240 + $0x54] sm:$0xf] %v2559
      %2624 = vst [vmem:[%s240 + $0x58] sm:$0xf] %v2560
      %2625 = vst [vmem:[%s240 + $0x5c] sm:$0xf] %v2561
      %2626 = vst [vmem:[%s240 + $0x60] sm:$0xf] %v2562
      %2627 = vst [vmem:[%s240 + $0x64] sm:$0xf] %v2563
      %2628 = vst [vmem:[%s240 + $0x68] sm:$0xf] %v2564
      %2629 = vst [vmem:[%s240 + $0x6c] sm:$0xf] %v2565
      %2630 = vst [vmem:[%s240 + $0x70] sm:$0xf] %v2566
      %2631 = vst [vmem:[%s240 + $0x74] sm:$0xf] %v2567
      %2632 = vst [vmem:[%s240 + $0x78] sm:$0xf] %v2568
      %2633 = vst [vmem:[%s240 + $0x7c] sm:$0xf] %v2569
      %s2634 = smul.u32 16, %s20
      %p2635 = scmp.lt.s32.totalorder %s19, 1
      %s2636 = scalar_select %p2635, %s19, 1
      %p2637 = scmp.lt.s32.totalorder %s2634, 15
      %s2638 = scalar_select %p2637, %s2634, 15
      %p2639 = scmp.lt.s32.totalorder %s21, 0
      %s2640 = scalar_select %p2639, %s21, 0
      %s2641 = smul.addr %s2638, 2
      %s2642 = sadd.s32 %s2640, %s2641
      %s2643 = smul.addr %s2636, 32
      %s2644 = sadd.s32 %s2642, %s2643
      %s2645 = smul.addr %s2644, 4
      %s2646 = scalar_lea.vmem %s3, %s2645
      // Predicated region
      $region33: #{basic_conv2d.1} parent=31 // pred_check
        %p2647 = pneg %p133
      $region34: #{basic_conv2d.1} parent=31 // pred_check_branch
        %2649 = sbr.rel (%p2647) target = $region36
      $region35: #{basic_conv2d.1} parent=31 // pred_region
        %s2650 = smul.u32 16, %s20
      $region36: #{basic_conv2d.1} parent=31 // pred_fallthru
        _
    $region32: #{basic_conv2d.1} parent=5 // pred_fallthru
      _
    %p2651 = scmp.le.s32.totalorder 2, %s9
    // Predicated region
    $region37: #{basic_conv2d.1} parent=5 // pred_check
      %p2652 = pneg %p2651
    $region38: #{basic_conv2d.1} parent=5 // pred_check_branch
      %2654 = sbr.rel (%p2652) target = $region40
    $region39: #{basic_conv2d.1} parent=5 // pred_region
      %s2655 = ssub.s32 %s9, 2
      // Predicated region
      $region41: #{basic_conv2d.1} parent=39 // pred_check
        %p2656 = pneg %p139
      $region42: #{basic_conv2d.1} parent=39 // pred_check_branch
        %2658 = sbr.rel (%p2656) target = $region44
      $region43: #{basic_conv2d.1} parent=39 // pred_region
        %s2659 = smul.u32 16, %s23
        %p2660 = scmp.lt.s32.totalorder %s22, 1
        %s2661 = scalar_select %p2660, %s22, 1
        %p2662 = scmp.lt.s32.totalorder %s2659, 15
        %s2663 = scalar_select %p2662, %s2659, 15
        %p2664 = scmp.lt.s32.totalorder %s24, 0
        %s2665 = scalar_select %p2664, %s24, 0
        %s2666 = smul.addr %s2663, 2
        %s2667 = sadd.s32 %s2665, %s2666
        %s2668 = smul.addr %s2661, 32
        %s2669 = sadd.s32 %s2667, %s2668
        %s2670 = smul.addr %s2669, 4
        %s2671 = scalar_lea.vmem %s3, %s2670
      $region44: #{basic_conv2d.1} parent=39 // pred_fallthru
        _
    $region40: #{basic_conv2d.1} parent=5 // pred_fallthru
      _
  $region6: #{basic_conv2d.1} parent=0 // loop_footer
    %s13 = sadd.s32 1, %s9
  $region7: #{basic_conv2d.1} parent=0 // loop_footer_branch
    %8 = sbr.rel target = $region3
  $region8: #{basic_conv2d.1} parent=0 // loop_exit
    _

</llo_original>
